<compile_context>
chip_gen: v7x
topology: tpu7x:2x2x1
jax: 0.10.0
libtpu: 0.0.40
codegen_flags: <defaults>
</compile_context>

<pallas_src>
import functools

import jax
import jax.numpy as jnp
from jax import lax
from jax.experimental import pallas as pl
from jax.experimental.pallas import tpu as pltpu

EPS = 1e-5


def _double_conv_kernel(x_ref, w1_ref, w2_ref, g1_ref, be1_ref, g2_ref, be2_ref,
                        out_ref, mid_ref, *, N, H, W, Cout):
    """Fused DoubleConv.

    x_ref  : (N, H+2, (W+2)*Cin) f32   spatially pre-padded input, (W, C) flattened
    w1_ref : (3*(W+2)*Cin,  W*Cout) bf16  banded conv1 weights
    w2_ref : (3*(W+2)*Cout, W*Cout) bf16  banded conv2 weights
    g*/be* : (1, Cout) f32  BatchNorm gamma / beta
    out_ref: (N*H, W*Cout) f32  lane-dense output, rows = (n, h), cols = (w, c)
    mid_ref: (N, H+2, (W+2)*Cout) f32 VMEM scratch for the padded intermediate
    """
    Wp = W + 2
    NH = N * H
    WC = W * Cout
    inv_nhw = 1.0 / (N * H * W)

    # One-hot (w, c) <-> c fold / expand matrices built from 2-D iota (tiny).
    lane = lax.broadcasted_iota(jnp.int32, (WC, Cout), 0)
    chan = lax.broadcasted_iota(jnp.int32, (WC, Cout), 1)
    fold = (lane % Cout == chan).astype(jnp.float32)            # (W*Cout, Cout)
    lane_t = lax.broadcasted_iota(jnp.int32, (Cout, WC), 1)
    chan_t = lax.broadcasted_iota(jnp.int32, (Cout, WC), 0)
    expand = (lane_t % Cout == chan_t).astype(jnp.float32)      # (Cout, W*Cout)

    def conv_banded(src_ref, w_ref):
        # 3x3 "same" conv as ONE bf16 MXU matmul with K = 3*Wp*C and a
        # lane-dense N = W*Cout output; only 3 full-width row-shifted slices.
        taps = [src_ref[:, dh:dh + H, :] for dh in range(3)]
        lhs = jnp.concatenate(taps, axis=-1).reshape(NH, 3 * src_ref.shape[2])
        return jnp.dot(lhs.astype(jnp.bfloat16), w_ref[...],
                       preferred_element_type=jnp.float32)

    def bn_relu(z, g_ref, be_ref):
        # Training-mode BatchNorm2d (biased variance over N*H*W) fused into a
        # single per-channel affine; per-channel stats folded with one small
        # MXU pass each; rsqrt goes to the otherwise-idle EUP slot.
        s1 = jnp.sum(z, axis=0, keepdims=True)                  # (1, W*Cout)
        s2 = jnp.sum(z * z, axis=0, keepdims=True)              # (1, W*Cout)
        mean = jnp.dot(s1, fold, preferred_element_type=jnp.float32) * inv_nhw
        ex2 = jnp.dot(s2, fold, preferred_element_type=jnp.float32) * inv_nhw
        var = ex2 - mean * mean
        scale = g_ref[...] * lax.rsqrt(var + EPS)               # (1, Cout)
        shift = be_ref[...] - mean * scale                      # (1, Cout)
        scale_f = jnp.dot(scale, expand, preferred_element_type=jnp.float32)
        shift_f = jnp.dot(shift, expand, preferred_element_type=jnp.float32)
        return jnp.maximum(z * scale_f + shift_f, 0.0)

    # ---- conv1 + BN1 + ReLU (conv bias dropped: cancelled by BN mean) ------
    z1 = conv_banded(x_ref, w1_ref)                             # (N*H, W*Cout) f32
    y1 = bn_relu(z1, g1_ref, be1_ref)

    # ---- re-pad intermediate: W-pad via lane concat of zero columns, H-pad
    #      by zeroing only the two border rows (no full-buffer zero fill). ----
    zcol = jnp.zeros((NH, Cout), jnp.float32)
    y1w = jnp.concatenate([zcol, y1, zcol], axis=-1)            # (N*H, Wp*Cout)
    zrow = jnp.zeros((N, 1, Wp * Cout), jnp.float32)
    mid_ref[:, 0:1, :] = zrow
    mid_ref[:, H + 1:H + 2, :] = zrow
    mid_ref[:, 1:H + 1, :] = y1w.reshape(N, H, Wp * Cout)

    # ---- conv2 + BN2 + ReLU ------------------------------------------------
    z2 = conv_banded(mid_ref, w2_ref)
    y2 = bn_relu(z2, g2_ref, be2_ref)

    out_ref[...] = y2                                           # unmasked lane-dense store


def _banded_conv_weight(w_hwio, W):
    """(3, 3, Cin, Cout) HWIO -> (3*(W+2)*Cin, W*Cout) banded matrix so a 3x3
    'same' conv over width-padded rows becomes a single matmul."""
    kh, kw, cin, cout = w_hwio.shape
    Wp = W + 2
    dw = jnp.arange(Wp)[:, None] - jnp.arange(W)[None, :]       # (Wp, W)
    valid = (dw >= 0) & (dw < kw)
    gathered = w_hwio[:, jnp.clip(dw, 0, kw - 1)]               # (kh, Wp, W, cin, cout)
    gathered = jnp.where(valid[None, :, :, None, None], gathered, 0.0)
    banded = jnp.transpose(gathered, (0, 1, 3, 2, 4))           # (kh, Wp, cin, W, cout)
    return banded.reshape(kh * Wp * cin, W * cout)


def double_conv(x_nchw, params):
    """Runs DoubleConv on an NCHW float32 input; returns NCHW output."""
    w1, b1, g1, be1, w2, b2, g2, be2 = params
    del b1, b2  # pre-BN conv biases are exactly cancelled by the BN mean subtraction
    N, Cin, H, W = x_nchw.shape
    Cout = w1.shape[-1]
    Hp, Wp = H + 2, W + 2

    # NCHW -> NHWC, zero-pad spatially, flatten (W, C) into the lane axis.
    x = jnp.transpose(x_nchw, (0, 2, 3, 1)).astype(jnp.float32)
    xp = jnp.pad(x, ((0, 0), (1, 1), (1, 1), (0, 0)))
    x_flat = xp.reshape(N, Hp, Wp * Cin)

    # Banded conv weights, stored / fed to the MXU in bf16.
    w1_b = _banded_conv_weight(w1.astype(jnp.float32), W).astype(jnp.bfloat16)
    w2_b = _banded_conv_weight(w2.astype(jnp.float32), W).astype(jnp.bfloat16)

    vec = lambda a: a.reshape(1, Cout).astype(jnp.float32)

    def fullspec(shape):
        return pl.BlockSpec(shape, lambda i: (0,) * len(shape))

    flops = (2 * (N * H) * (3 * Wp * Cin) * (W * Cout)
             + 2 * (N * H) * (3 * Wp * Cout) * (W * Cout)
             + 10 * N * H * W * Cout)
    bytes_accessed = (x_flat.size * 4 + (w1_b.size + w2_b.size) * 2
                      + 4 * Cout * 4 + N * H * W * Cout * 4)

    kernel = functools.partial(_double_conv_kernel, N=N, H=H, W=W, Cout=Cout)

    out2d = pl.pallas_call(
        kernel,
        out_shape=jax.ShapeDtypeStruct((N * H, W * Cout), jnp.float32),
        grid=(1,),
        in_specs=[fullspec(x_flat.shape),
                  fullspec(w1_b.shape), fullspec(w2_b.shape),
                  fullspec((1, Cout)), fullspec((1, Cout)),
                  fullspec((1, Cout)), fullspec((1, Cout))],
        out_specs=fullspec((N * H, W * Cout)),
        scratch_shapes=[pltpu.VMEM((N, Hp, Wp * Cout), jnp.float32)],
        compiler_params=pltpu.CompilerParams(
            dimension_semantics=("arbitrary",),
            vmem_limit_bytes=32 * 1024 * 1024),
        cost_estimate=pl.CostEstimate(flops=flops,
                                      transcendentals=2 * Cout,
                                      bytes_accessed=bytes_accessed),
    )(x_flat, w1_b, w2_b, vec(g1), vec(be1), vec(g2), vec(be2))

    out = out2d.reshape(N, H, W, Cout)
    return jnp.transpose(out, (0, 3, 1, 2))                     # back to NCHW


def double_conv_ref(x_nchw, params):
    """Pure-JAX f32 reference (XLA convolutions, with conv biases)."""
    w1, b1, g1, be1, w2, b2, g2, be2 = params

    def conv(x, w, b):
        y = lax.conv_general_dilated(
            x, w, window_strides=(1, 1), padding="SAME",
            dimension_numbers=("NHWC", "HWIO", "NHWC"))
        return y + b.reshape(1, 1, 1, -1)

    def bn_relu(z, g, be):
        m = z.mean(axis=(0, 1, 2), keepdims=True)
        v = ((z - m) ** 2).mean(axis=(0, 1, 2), keepdims=True)
        y = g.reshape(1, 1, 1, -1) * (z - m) / jnp.sqrt(v + EPS) \
            + be.reshape(1, 1, 1, -1)
        return jnp.maximum(y, 0.0)

    x = jnp.transpose(x_nchw, (0, 2, 3, 1)).astype(jnp.float32)
    y = bn_relu(conv(x, w1, b1), g1, be1)
    y = bn_relu(conv(y, w2, b2), g2, be2)
    return jnp.transpose(y, (0, 3, 1, 2))


def init_params(key, in_ch, out_ch):
    k1, k2, k3, k4 = jax.random.split(key, 4)
    # Conv weights in HWIO layout; BN params at PyTorch defaults (gamma=1, beta=0).
    w1 = 0.1 * jax.random.normal(k1, (3, 3, in_ch, out_ch), jnp.float32)
    b1 = 0.1 * jax.random.normal(k2, (out_ch,), jnp.float32)
    w2 = 0.1 * jax.random.normal(k3, (3, 3, out_ch, out_ch), jnp.float32)
    b2 = 0.1 * jax.random.normal(k4, (out_ch,), jnp.float32)
    g1 = jnp.ones((out_ch,), jnp.float32)
    be1 = jnp.zeros((out_ch,), jnp.float32)
    g2 = jnp.ones((out_ch,), jnp.float32)
    be2 = jnp.zeros((out_ch,), jnp.float32)
    return (w1, b1, g1, be1, w2, b2, g2, be2)


if __name__ == "__main__":
    key = jax.random.PRNGKey(0)
    kx, kp = jax.random.split(key)

    N, IN_CH, OUT_CH, H, W = 2, 4, 8, 16, 16
    x = jax.random.normal(kx, (N, IN_CH, H, W), jnp.float32)    # NCHW like PyTorch
    params = init_params(kp, IN_CH, OUT_CH)

    out = jax.block_until_ready(double_conv(x, params))
    ref = jax.block_until_ready(double_conv_ref(x, params))

    assert out.shape == (N, OUT_CH, H, W)
    # Kernel feeds bf16 operands to the MXU (f32 accumulation / BN math); vs the
    # f32 reference the max-abs deviation is ~1e-2, so use a mixed-precision
    # tolerance.  Real bugs (wrong taps / banding) would show up as O(1) errors.
    assert jnp.allclose(out, ref, rtol=5e-2, atol=5e-2), (
        float(jnp.max(jnp.abs(out - ref))))

    print("KERNEL_OK")
</pallas_src>

<mosaic_0001>
module attributes {stable_mosaic.version = 11 : i64} {
  func.func @_double_conv_kernel(%arg0: i32, %arg1: memref<2x18x72xf32, #tpu.memory_space<vmem>>, %arg2: memref<216x128xbf16, #tpu.memory_space<vmem>>, %arg3: memref<432x128xbf16, #tpu.memory_space<vmem>>, %arg4: memref<1x8xf32, #tpu.memory_space<vmem>>, %arg5: memref<1x8xf32, #tpu.memory_space<vmem>>, %arg6: memref<1x8xf32, #tpu.memory_space<vmem>>, %arg7: memref<1x8xf32, #tpu.memory_space<vmem>>, %arg8: memref<32x128xf32, #tpu.memory_space<vmem>>, %arg9: memref<2x18x144xf32, #tpu.memory_space<vmem>>) attributes {dimension_semantics = [#tpu.dimension_semantics<arbitrary>], iteration_bounds = array<i64: 1>, scalar_prefetch = 0 : i64, scratch_operands = 1 : i64, tpu.core_type = #tpu.core_type<tc>, window_params = [{pipeline_mode = #tpu.pipeline_mode<synchronous>, transform_indices = @transform_0, window_bounds = array<i64: 2, 18, 72>}, {pipeline_mode = #tpu.pipeline_mode<synchronous>, transform_indices = @transform_1, window_bounds = array<i64: 216, 128>}, {pipeline_mode = #tpu.pipeline_mode<synchronous>, transform_indices = @transform_2, window_bounds = array<i64: 432, 128>}, {pipeline_mode = #tpu.pipeline_mode<synchronous>, transform_indices = @transform_3, window_bounds = array<i64: 1, 8>}, {pipeline_mode = #tpu.pipeline_mode<synchronous>, transform_indices = @transform_4, window_bounds = array<i64: 1, 8>}, {pipeline_mode = #tpu.pipeline_mode<synchronous>, transform_indices = @transform_5, window_bounds = array<i64: 1, 8>}, {pipeline_mode = #tpu.pipeline_mode<synchronous>, transform_indices = @transform_6, window_bounds = array<i64: 1, 8>}, {pipeline_mode = #tpu.pipeline_mode<synchronous>, transform_indices = @transform_7, window_bounds = array<i64: 32, 128>}]} {
    %0 = tpu.iota {dimensions = array<i32: 0>} : vector<128x8xi32>
    %1 = tpu.iota {dimensions = array<i32: 1>} : vector<128x8xi32>
    %c8_i32 = arith.constant 8 : i32
    %c0_i32 = arith.constant 0 : i32
    %2 = arith.cmpi eq, %c8_i32, %c0_i32 : i32
    %c1_i32 = arith.constant 1 : i32
    %3 = arith.select %2, %c1_i32, %c8_i32 : i32
    %4 = vector.broadcast %3 : i32 to vector<128x8xi32>
    %5 = arith.remsi %0, %4 : vector<128x8xi32>
    %c0_i32_0 = arith.constant 0 : i32
    %6 = vector.broadcast %c0_i32_0 : i32 to vector<128x8xi32>
    %7 = arith.cmpi ne, %5, %6 : vector<128x8xi32>
    %c0_i32_1 = arith.constant 0 : i32
    %8 = vector.broadcast %c0_i32_1 : i32 to vector<128x8xi32>
    %9 = arith.cmpi slt, %5, %8 : vector<128x8xi32>
    %c0_i32_2 = arith.constant 0 : i32
    %10 = arith.cmpi slt, %3, %c0_i32_2 : i32
    %11 = vector.broadcast %10 : i1 to vector<128x8xi1>
    %12 = vector.broadcast %11 : vector<128x8xi1> to vector<128x8xi1>
    %13 = arith.xori %9, %12 : vector<128x8xi1>
    %14 = arith.andi %13, %7 : vector<128x8xi1>
    %15 = vector.broadcast %3 : i32 to vector<128x8xi32>
    %16 = arith.addi %5, %15 : vector<128x8xi32>
    %17 = arith.select %14, %16, %5 : vector<128x8xi1>, vector<128x8xi32>
    %18 = arith.cmpi eq, %17, %1 : vector<128x8xi32>
    %19 = arith.extui %18 : vector<128x8xi1> to vector<128x8xi32>
    %20 = arith.sitofp %19 : vector<128x8xi32> to vector<128x8xf32>
    %21 = tpu.iota {dimensions = array<i32: 1>} : vector<8x128xi32>
    %22 = tpu.iota {dimensions = array<i32: 0>} : vector<8x128xi32>
    %c8_i32_3 = arith.constant 8 : i32
    %c0_i32_4 = arith.constant 0 : i32
    %23 = arith.cmpi eq, %c8_i32_3, %c0_i32_4 : i32
    %c1_i32_5 = arith.constant 1 : i32
    %24 = arith.select %23, %c1_i32_5, %c8_i32_3 : i32
    %25 = vector.broadcast %24 : i32 to vector<8x128xi32>
    %26 = arith.remsi %21, %25 : vector<8x128xi32>
    %c0_i32_6 = arith.constant 0 : i32
    %27 = vector.broadcast %c0_i32_6 : i32 to vector<8x128xi32>
    %28 = arith.cmpi ne, %26, %27 : vector<8x128xi32>
    %c0_i32_7 = arith.constant 0 : i32
    %29 = vector.broadcast %c0_i32_7 : i32 to vector<8x128xi32>
    %30 = arith.cmpi slt, %26, %29 : vector<8x128xi32>
    %c0_i32_8 = arith.constant 0 : i32
    %31 = arith.cmpi slt, %24, %c0_i32_8 : i32
    %32 = vector.broadcast %31 : i1 to vector<8x128xi1>
    %33 = vector.broadcast %32 : vector<8x128xi1> to vector<8x128xi1>
    %34 = arith.xori %30, %33 : vector<8x128xi1>
    %35 = arith.andi %34, %28 : vector<8x128xi1>
    %36 = vector.broadcast %24 : i32 to vector<8x128xi32>
    %37 = arith.addi %26, %36 : vector<8x128xi32>
    %38 = arith.select %35, %37, %26 : vector<8x128xi1>, vector<8x128xi32>
    %39 = arith.cmpi eq, %38, %22 : vector<8x128xi32>
    %40 = arith.extui %39 : vector<8x128xi1> to vector<8x128xi32>
    %41 = arith.sitofp %40 : vector<8x128xi32> to vector<8x128xf32>
    %c0 = arith.constant 0 : index
    %c0_9 = arith.constant 0 : index
    %c0_10 = arith.constant 0 : index
    %42 = vector.load %arg1[%c0, %c0_9, %c0_10] : memref<2x18x72xf32, #tpu.memory_space<vmem>>, vector<2x16x72xf32>
    %c0_11 = arith.constant 0 : index
    %c1 = arith.constant 1 : index
    %c0_12 = arith.constant 0 : index
    %43 = vector.load %arg1[%c0_11, %c1, %c0_12] : memref<2x18x72xf32, #tpu.memory_space<vmem>>, vector<2x16x72xf32>
    %c0_13 = arith.constant 0 : index
    %c2 = arith.constant 2 : index
    %c0_14 = arith.constant 0 : index
    %44 = vector.load %arg1[%c0_13, %c2, %c0_14] : memref<2x18x72xf32, #tpu.memory_space<vmem>>, vector<2x16x72xf32>
    %45 = tpu.concatenate %42, %43, %44 in 2 : vector<2x16x72xf32>, vector<2x16x72xf32>, vector<2x16x72xf32> -> vector<2x16x216xf32>
    %46 = vector.shape_cast %45 : vector<2x16x216xf32> to vector<32x216xf32>
    %47 = arith.truncf %46 : vector<32x216xf32> to vector<32x216xbf16>
    %c0_15 = arith.constant 0 : index
    %c0_16 = arith.constant 0 : index
    %48 = vector.load %arg2[%c0_15, %c0_16] : memref<216x128xbf16, #tpu.memory_space<vmem>>, vector<216x128xbf16>
    %cst = arith.constant dense<0.000000e+00> : vector<32x128xf32>
    %49 = tpu.matmul %47, %48, %cst {dimension_numbers = #tpu.dot_dimension_numbers<[1], [0], [0], [1], [0, 0, 1, 1], [], []>} : vector<32x216xbf16>, vector<216x128xbf16>, vector<32x128xf32> -> vector<32x128xf32>
    %cst_17 = arith.constant dense<0.000000e+00> : vector<128xf32>
    %50 = vector.multi_reduction <add>, %49, %cst_17 [0] : vector<32x128xf32> to vector<128xf32>
    %51 = vector.shape_cast %50 : vector<128xf32> to vector<1x128xf32>
    %52 = arith.mulf %49, %49 : vector<32x128xf32>
    %cst_18 = arith.constant dense<0.000000e+00> : vector<128xf32>
    %53 = vector.multi_reduction <add>, %52, %cst_18 [0] : vector<32x128xf32> to vector<128xf32>
    %54 = vector.shape_cast %53 : vector<128xf32> to vector<1x128xf32>
    %cst_19 = arith.constant dense<0.000000e+00> : vector<1x8xf32>
    %55 = tpu.matmul %51, %20, %cst_19 {dimension_numbers = #tpu.dot_dimension_numbers<[1], [0], [0], [1], [0, 0, 1, 1], [], []>} : vector<1x128xf32>, vector<128x8xf32>, vector<1x8xf32> -> vector<1x8xf32>
    %cst_20 = arith.constant 0.001953125 : f32
    %56 = vector.broadcast %cst_20 : f32 to vector<1x8xf32>
    %57 = arith.mulf %55, %56 : vector<1x8xf32>
    %cst_21 = arith.constant dense<0.000000e+00> : vector<1x8xf32>
    %58 = tpu.matmul %54, %20, %cst_21 {dimension_numbers = #tpu.dot_dimension_numbers<[1], [0], [0], [1], [0, 0, 1, 1], [], []>} : vector<1x128xf32>, vector<128x8xf32>, vector<1x8xf32> -> vector<1x8xf32>
    %cst_22 = arith.constant 0.001953125 : f32
    %59 = vector.broadcast %cst_22 : f32 to vector<1x8xf32>
    %60 = arith.mulf %58, %59 : vector<1x8xf32>
    %61 = arith.mulf %57, %57 : vector<1x8xf32>
    %62 = arith.subf %60, %61 : vector<1x8xf32>
    %c0_23 = arith.constant 0 : index
    %c0_24 = arith.constant 0 : index
    %63 = vector.load %arg4[%c0_23, %c0_24] : memref<1x8xf32, #tpu.memory_space<vmem>>, vector<1x8xf32>
    %cst_25 = arith.constant 9.99999974E-6 : f32
    %64 = vector.broadcast %cst_25 : f32 to vector<1x8xf32>
    %65 = arith.addf %62, %64 : vector<1x8xf32>
    %66 = math.rsqrt %65 : vector<1x8xf32>
    %67 = arith.mulf %63, %66 : vector<1x8xf32>
    %c0_26 = arith.constant 0 : index
    %c0_27 = arith.constant 0 : index
    %68 = vector.load %arg5[%c0_26, %c0_27] : memref<1x8xf32, #tpu.memory_space<vmem>>, vector<1x8xf32>
    %69 = arith.mulf %57, %67 : vector<1x8xf32>
    %70 = arith.subf %68, %69 : vector<1x8xf32>
    %cst_28 = arith.constant dense<0.000000e+00> : vector<1x128xf32>
    %71 = tpu.matmul %67, %41, %cst_28 {dimension_numbers = #tpu.dot_dimension_numbers<[1], [0], [0], [1], [0, 0, 1, 1], [], []>} : vector<1x8xf32>, vector<8x128xf32>, vector<1x128xf32> -> vector<1x128xf32>
    %cst_29 = arith.constant dense<0.000000e+00> : vector<1x128xf32>
    %72 = tpu.matmul %70, %41, %cst_29 {dimension_numbers = #tpu.dot_dimension_numbers<[1], [0], [0], [1], [0, 0, 1, 1], [], []>} : vector<1x8xf32>, vector<8x128xf32>, vector<1x128xf32> -> vector<1x128xf32>
    %73 = vector.broadcast %71 : vector<1x128xf32> to vector<32x128xf32>
    %74 = arith.mulf %49, %73 : vector<32x128xf32>
    %75 = vector.broadcast %72 : vector<1x128xf32> to vector<32x128xf32>
    %76 = arith.addf %74, %75 : vector<32x128xf32>
    %cst_30 = arith.constant 0.000000e+00 : f32
    %77 = vector.broadcast %cst_30 : f32 to vector<32x128xf32>
    %78 = arith.maximumf %76, %77 : vector<32x128xf32>
    %cst_31 = arith.constant 0.000000e+00 : f32
    %79 = vector.broadcast %cst_31 : f32 to vector<32x8xf32>
    %80 = tpu.concatenate %79, %78, %79 in 1 : vector<32x8xf32>, vector<32x128xf32>, vector<32x8xf32> -> vector<32x144xf32>
    %cst_32 = arith.constant 0.000000e+00 : f32
    %81 = vector.broadcast %cst_32 : f32 to vector<2x1x144xf32>
    %c0_33 = arith.constant 0 : index
    %c0_34 = arith.constant 0 : index
    %c0_35 = arith.constant 0 : index
    %82 = vector.load %arg9[%c0_33, %c0_34, %c0_35] : memref<2x18x144xf32, #tpu.memory_space<vmem>>, vector<2x1x144xf32>
    tpu.vector_store %arg9[%c0_33, %c0_34, %c0_35], %81 {strides = array<i32>} : memref<2x18x144xf32, #tpu.memory_space<vmem>>, vector<2x1x144xf32>,
    %c0_36 = arith.constant 0 : index
    %c17 = arith.constant 17 : index
    %c0_37 = arith.constant 0 : index
    %83 = vector.load %arg9[%c0_36, %c17, %c0_37] : memref<2x18x144xf32, #tpu.memory_space<vmem>>, vector<2x1x144xf32>
    tpu.vector_store %arg9[%c0_36, %c17, %c0_37], %81 {strides = array<i32>} : memref<2x18x144xf32, #tpu.memory_space<vmem>>, vector<2x1x144xf32>,
    %84 = vector.shape_cast %80 : vector<32x144xf32> to vector<2x16x144xf32>
    %c0_38 = arith.constant 0 : index
    %c1_39 = arith.constant 1 : index
    %c0_40 = arith.constant 0 : index
    %85 = vector.load %arg9[%c0_38, %c1_39, %c0_40] : memref<2x18x144xf32, #tpu.memory_space<vmem>>, vector<2x16x144xf32>
    tpu.vector_store %arg9[%c0_38, %c1_39, %c0_40], %84 {strides = array<i32>} : memref<2x18x144xf32, #tpu.memory_space<vmem>>, vector<2x16x144xf32>,
    %c0_41 = arith.constant 0 : index
    %c0_42 = arith.constant 0 : index
    %c0_43 = arith.constant 0 : index
    %86 = vector.load %arg9[%c0_41, %c0_42, %c0_43] : memref<2x18x144xf32, #tpu.memory_space<vmem>>, vector<2x16x144xf32>
    %c0_44 = arith.constant 0 : index
    %c1_45 = arith.constant 1 : index
    %c0_46 = arith.constant 0 : index
    %87 = vector.load %arg9[%c0_44, %c1_45, %c0_46] : memref<2x18x144xf32, #tpu.memory_space<vmem>>, vector<2x16x144xf32>
    %c0_47 = arith.constant 0 : index
    %c2_48 = arith.constant 2 : index
    %c0_49 = arith.constant 0 : index
    %88 = vector.load %arg9[%c0_47, %c2_48, %c0_49] : memref<2x18x144xf32, #tpu.memory_space<vmem>>, vector<2x16x144xf32>
    %89 = tpu.concatenate %86, %87, %88 in 2 : vector<2x16x144xf32>, vector<2x16x144xf32>, vector<2x16x144xf32> -> vector<2x16x432xf32>
    %90 = vector.shape_cast %89 : vector<2x16x432xf32> to vector<32x432xf32>
    %91 = arith.truncf %90 : vector<32x432xf32> to vector<32x432xbf16>
    %c0_50 = arith.constant 0 : index
    %c0_51 = arith.constant 0 : index
    %92 = vector.load %arg3[%c0_50, %c0_51] : memref<432x128xbf16, #tpu.memory_space<vmem>>, vector<432x128xbf16>
    %cst_52 = arith.constant dense<0.000000e+00> : vector<32x128xf32>
    %93 = tpu.matmul %91, %92, %cst_52 {dimension_numbers = #tpu.dot_dimension_numbers<[1], [0], [0], [1], [0, 0, 1, 1], [], []>} : vector<32x432xbf16>, vector<432x128xbf16>, vector<32x128xf32> -> vector<32x128xf32>
    %cst_53 = arith.constant dense<0.000000e+00> : vector<128xf32>
    %94 = vector.multi_reduction <add>, %93, %cst_53 [0] : vector<32x128xf32> to vector<128xf32>
    %95 = vector.shape_cast %94 : vector<128xf32> to vector<1x128xf32>
    %96 = arith.mulf %93, %93 : vector<32x128xf32>
    %cst_54 = arith.constant dense<0.000000e+00> : vector<128xf32>
    %97 = vector.multi_reduction <add>, %96, %cst_54 [0] : vector<32x128xf32> to vector<128xf32>
    %98 = vector.shape_cast %97 : vector<128xf32> to vector<1x128xf32>
    %cst_55 = arith.constant dense<0.000000e+00> : vector<1x8xf32>
    %99 = tpu.matmul %95, %20, %cst_55 {dimension_numbers = #tpu.dot_dimension_numbers<[1], [0], [0], [1], [0, 0, 1, 1], [], []>} : vector<1x128xf32>, vector<128x8xf32>, vector<1x8xf32> -> vector<1x8xf32>
    %cst_56 = arith.constant 0.001953125 : f32
    %100 = vector.broadcast %cst_56 : f32 to vector<1x8xf32>
    %101 = arith.mulf %99, %100 : vector<1x8xf32>
    %cst_57 = arith.constant dense<0.000000e+00> : vector<1x8xf32>
    %102 = tpu.matmul %98, %20, %cst_57 {dimension_numbers = #tpu.dot_dimension_numbers<[1], [0], [0], [1], [0, 0, 1, 1], [], []>} : vector<1x128xf32>, vector<128x8xf32>, vector<1x8xf32> -> vector<1x8xf32>
    %cst_58 = arith.constant 0.001953125 : f32
    %103 = vector.broadcast %cst_58 : f32 to vector<1x8xf32>
    %104 = arith.mulf %102, %103 : vector<1x8xf32>
    %105 = arith.mulf %101, %101 : vector<1x8xf32>
    %106 = arith.subf %104, %105 : vector<1x8xf32>
    %c0_59 = arith.constant 0 : index
    %c0_60 = arith.constant 0 : index
    %107 = vector.load %arg6[%c0_59, %c0_60] : memref<1x8xf32, #tpu.memory_space<vmem>>, vector<1x8xf32>
    %cst_61 = arith.constant 9.99999974E-6 : f32
    %108 = vector.broadcast %cst_61 : f32 to vector<1x8xf32>
    %109 = arith.addf %106, %108 : vector<1x8xf32>
    %110 = math.rsqrt %109 : vector<1x8xf32>
    %111 = arith.mulf %107, %110 : vector<1x8xf32>
    %c0_62 = arith.constant 0 : index
    %c0_63 = arith.constant 0 : index
    %112 = vector.load %arg7[%c0_62, %c0_63] : memref<1x8xf32, #tpu.memory_space<vmem>>, vector<1x8xf32>
    %113 = arith.mulf %101, %111 : vector<1x8xf32>
    %114 = arith.subf %112, %113 : vector<1x8xf32>
    %cst_64 = arith.constant dense<0.000000e+00> : vector<1x128xf32>
    %115 = tpu.matmul %111, %41, %cst_64 {dimension_numbers = #tpu.dot_dimension_numbers<[1], [0], [0], [1], [0, 0, 1, 1], [], []>} : vector<1x8xf32>, vector<8x128xf32>, vector<1x128xf32> -> vector<1x128xf32>
    %cst_65 = arith.constant dense<0.000000e+00> : vector<1x128xf32>
    %116 = tpu.matmul %114, %41, %cst_65 {dimension_numbers = #tpu.dot_dimension_numbers<[1], [0], [0], [1], [0, 0, 1, 1], [], []>} : vector<1x8xf32>, vector<8x128xf32>, vector<1x128xf32> -> vector<1x128xf32>
    %117 = vector.broadcast %115 : vector<1x128xf32> to vector<32x128xf32>
    %118 = arith.mulf %93, %117 : vector<32x128xf32>
    %119 = vector.broadcast %116 : vector<1x128xf32> to vector<32x128xf32>
    %120 = arith.addf %118, %119 : vector<32x128xf32>
    %cst_66 = arith.constant 0.000000e+00 : f32
    %121 = vector.broadcast %cst_66 : f32 to vector<32x128xf32>
    %122 = arith.maximumf %120, %121 : vector<32x128xf32>
    %c0_67 = arith.constant 0 : index
    %c0_68 = arith.constant 0 : index
    %123 = vector.load %arg8[%c0_67, %c0_68] : memref<32x128xf32, #tpu.memory_space<vmem>>, vector<32x128xf32>
    tpu.vector_store %arg8[%c0_67, %c0_68], %122 {strides = array<i32>} : memref<32x128xf32, #tpu.memory_space<vmem>>, vector<32x128xf32>,
    return
  }
  func.func @transform_0(%arg0: i32) -> (i32, i32, i32) {
    %c0_i32 = arith.constant 0 : i32
    %c0_i32_0 = arith.constant 0 : i32
    %c0_i32_1 = arith.constant 0 : i32
    %c0_i32_2 = arith.constant 0 : i32
    return %c0_i32, %c0_i32_0, %c0_i32_1 : i32, i32, i32
  }
  func.func @transform_1(%arg0: i32) -> (i32, i32) {
    %c0_i32 = arith.constant 0 : i32
    %c0_i32_0 = arith.constant 0 : i32
    %c0_i32_1 = arith.constant 0 : i32
    return %c0_i32, %c0_i32_0 : i32, i32
  }
  func.func @transform_2(%arg0: i32) -> (i32, i32) {
    %c0_i32 = arith.constant 0 : i32
    %c0_i32_0 = arith.constant 0 : i32
    %c0_i32_1 = arith.constant 0 : i32
    return %c0_i32, %c0_i32_0 : i32, i32
  }
  func.func @transform_3(%arg0: i32) -> (i32, i32) {
    %c0_i32 = arith.constant 0 : i32
    %c0_i32_0 = arith.constant 0 : i32
    %c0_i32_1 = arith.constant 0 : i32
    return %c0_i32, %c0_i32_0 : i32, i32
  }
  func.func @transform_4(%arg0: i32) -> (i32, i32) {
    %c0_i32 = arith.constant 0 : i32
    %c0_i32_0 = arith.constant 0 : i32
    %c0_i32_1 = arith.constant 0 : i32
    return %c0_i32, %c0_i32_0 : i32, i32
  }
  func.func @transform_5(%arg0: i32) -> (i32, i32) {
    %c0_i32 = arith.constant 0 : i32
    %c0_i32_0 = arith.constant 0 : i32
    %c0_i32_1 = arith.constant 0 : i32
    return %c0_i32, %c0_i32_0 : i32, i32
  }
  func.func @transform_6(%arg0: i32) -> (i32, i32) {
    %c0_i32 = arith.constant 0 : i32
    %c0_i32_0 = arith.constant 0 : i32
    %c0_i32_1 = arith.constant 0 : i32
    return %c0_i32, %c0_i32_0 : i32, i32
  }
  func.func @transform_7(%arg0: i32) -> (i32, i32) {
    %c0_i32 = arith.constant 0 : i32
    %c0_i32_0 = arith.constant 0 : i32
    %c0_i32_1 = arith.constant 0 : i32
    return %c0_i32, %c0_i32_0 : i32, i32
  }
}

</mosaic_0001>

<llo_original>
// kernel: tpu_custom_call.1
$region0: #{tpu_custom_call.1}
  #allocation0 [shape = 'u32[]', space=smem, size = 0x4, offset = 0x4, fixed_abs, tag = 'smem constant byte address 0x4 - core index']
  #allocation1 [shape = 'u32[144,128]{1,0:T(1,128)}', space=vmem, size = 0x12000, scoped, tag = 'internal scratch']
  #allocation2 [shape = 'f32[2,18,144]{2,1,0:T(8,128)}', space=vmem, size = 0xc000, scoped, tag = 'scratch operand']
  %s0 = inlined_call_operand.vmem [shape: f32[2,18,72], index: 0, kind: input, shape index: {}]
  %s1 = inlined_call_operand.hbm [shape: bf16[216,128], index: 1, kind: input, shape index: {}]
  %s2 = inlined_call_operand.hbm [shape: bf16[432,128], index: 2, kind: input, shape index: {}]
  %s3 = inlined_call_operand.vmem [shape: f32[1,8], index: 3, kind: input, shape index: {}]
  %s4 = inlined_call_operand.vmem [shape: f32[1,8], index: 4, kind: input, shape index: {}]
  %s5 = inlined_call_operand.vmem [shape: f32[1,8], index: 5, kind: input, shape index: {}]
  %s6 = inlined_call_operand.vmem [shape: f32[1,8], index: 6, kind: input, shape index: {}]
  %s7 = inlined_call_operand.hbm [shape: f32[32,128], index: 7, kind: output, shape index: {}]
  %s8 = sld [smem:[#allocation0]]
  $region46: #{tpu_custom_call.1} parent=0
    _
  %s10 = ssub.s32 1, %s8
  %s11 = scalar_select 0, %s10, %s8
  $region1: #{tpu_custom_call.1} parent=0
    #allocation3 [shape = 'u8[55296]{0}', space=vmem, size = 0xd800, scoped, tag = 'input window, operand 1, single buffered']
    #allocation4 [shape = 's32[1]{0}', space=sflag, size = 0x4, scoped, tag = 'scoped memory for tpu_custom_call.1']
    #allocation5 [shape = 's32[1]{0}', space=sflag, size = 0x4, scoped, tag = 'scoped memory for tpu_custom_call.1']
    #allocation6 [shape = 'u8[110592]{0}', space=vmem, size = 0x1b000, scoped, tag = 'input window, operand 2, single buffered']
    #allocation7 [shape = 's32[1]{0}', space=sflag, size = 0x4, scoped, tag = 'scoped memory for tpu_custom_call.1']
    #allocation8 [shape = 'u8[16384]{0}', space=vmem, size = 0x4000, scoped, tag = 'output window, operand 0, single buffered']
    %12 = vsyncpa [#allocation4], 0
    %13 = vsyncpa [#allocation7], 0
    %14 = vsyncpa [#allocation5], 0
    // Predicated region
    $region2: #{tpu_custom_call.1} parent=1 // pred_check
      _
    $region3: #{tpu_custom_call.1} parent=1 // pred_check_branch
      %16 = sbr.rel (0) target = $region5
    $region4: #{tpu_custom_call.1} parent=1 // pred_region
      _
    $region5: #{tpu_custom_call.1} parent=1 // pred_fallthru
      _
    // Predicated region
    $region6: #{tpu_custom_call.1} parent=1 // pred_check
      _
    $region7: #{tpu_custom_call.1} parent=1 // pred_check_branch
      %18 = sbr.rel (0) target = $region9
    $region8: #{tpu_custom_call.1} parent=1 // pred_region
      %s20 = ssub.s32 1728, 1728
      %21 = vsyncadd [#allocation4], %s20
      %s22 = sshll.u32 [#allocation3], 4
      %s23 = int_to_ptr.vmem [resolvable:$true] %s22
      %28 = dma.hbm_to_vmem [thread:$0]  %s1, 1728, %s23, [#allocation4], 64, 64, 4
    $region9: #{tpu_custom_call.1} parent=1 // pred_fallthru
      _
    // Predicated region
    $region10: #{tpu_custom_call.1} parent=1 // pred_check
      _
    $region11: #{tpu_custom_call.1} parent=1 // pred_check_branch
      %30 = sbr.rel (0) target = $region13
    $region12: #{tpu_custom_call.1} parent=1 // pred_region
      %s32 = ssub.s32 3456, 3456
      %33 = vsyncadd [#allocation7], %s32
      %s34 = sshll.u32 [#allocation6], 4
      %s35 = int_to_ptr.vmem [resolvable:$true] %s34
      %40 = dma.hbm_to_vmem [thread:$0]  %s2, 3456, %s35, [#allocation7], 64, 64, 4
    $region13: #{tpu_custom_call.1} parent=1 // pred_fallthru
      _
    // Predicated region
    $region14: #{tpu_custom_call.1} parent=1 // pred_check
      _
    $region15: #{tpu_custom_call.1} parent=1 // pred_check_branch
      %42 = sbr.rel (0) target = $region17
    $region16: #{tpu_custom_call.1} parent=1 // pred_region
      _
    $region17: #{tpu_custom_call.1} parent=1 // pred_fallthru
      _
    // Predicated region
    $region18: #{tpu_custom_call.1} parent=1 // pred_check
      _
    $region19: #{tpu_custom_call.1} parent=1 // pred_check_branch
      %44 = sbr.rel (0) target = $region21
    $region20: #{tpu_custom_call.1} parent=1 // pred_region
      _
    $region21: #{tpu_custom_call.1} parent=1 // pred_fallthru
      _
    // Predicated region
    $region22: #{tpu_custom_call.1} parent=1 // pred_check
      _
    $region23: #{tpu_custom_call.1} parent=1 // pred_check_branch
      %46 = sbr.rel (0) target = $region25
    $region24: #{tpu_custom_call.1} parent=1 // pred_region
      _
    $region25: #{tpu_custom_call.1} parent=1 // pred_fallthru
      _
    // Predicated region
    $region26: #{tpu_custom_call.1} parent=1 // pred_check
      _
    $region27: #{tpu_custom_call.1} parent=1 // pred_check_branch
      %48 = sbr.rel (0) target = $region29
    $region28: #{tpu_custom_call.1} parent=1 // pred_region
      _
    $region29: #{tpu_custom_call.1} parent=1 // pred_fallthru
      _
    // Predicated region
    $region30: #{tpu_custom_call.1} parent=1 // pred_check
      _
    $region31: #{tpu_custom_call.1} parent=1 // pred_check_branch
      %50 = sbr.rel (0) target = $region33
    $region32: #{tpu_custom_call.1} parent=1 // pred_region
      %51 = dma.done [#allocation4], 1728
    $region33: #{tpu_custom_call.1} parent=1 // pred_fallthru
      _
    // Predicated region
    $region34: #{tpu_custom_call.1} parent=1 // pred_check
      _
    $region35: #{tpu_custom_call.1} parent=1 // pred_check_branch
      %53 = sbr.rel (0) target = $region37
    $region36: #{tpu_custom_call.1} parent=1 // pred_region
      %54 = dma.done [#allocation7], 3456
    $region37: #{tpu_custom_call.1} parent=1 // pred_fallthru
      _
    %v56 = vlaneseq
    %v57 = vshrl.u32 %v56, 7
    %v58 = vadd.s32 %v57, 8
    %v59 = vadd.s32 %v57, 16
    %v60 = vadd.s32 %v57, 24
    %v61 = vadd.s32 %v57, 32
    %v62 = vadd.s32 %v57, 40
    %v63 = vadd.s32 %v57, 48
    %v64 = vadd.s32 %v57, 56
    %v65 = vadd.s32 %v57, 64
    %v66 = vadd.s32 %v57, 72
    %v67 = vadd.s32 %v57, 80
    %v68 = vadd.s32 %v57, 88
    %v69 = vadd.s32 %v57, 96
    %v70 = vadd.s32 %v57, 104
    %v71 = vadd.s32 %v57, 112
    %v72 = vadd.s32 %v57, 120
    %v73 = vlaneseq
    %v74 = vand.u32 %v73, 127
    %vm75 = vcmp.lt.s32.totalorder %v57, 0
    %v76 = vsub.s32 0, %v57
    %v77 = vsel %vm75, %v76, %v57
    %v78 = vshrl.u32 %v77, 3
    %v79 = vand.u32 %v77, 7
    %v80 = vsub.s32 0, %v79
    %v81 = vsel %vm75, %v80, %v79
    %vm82 = vcmp.lt.s32.totalorder %v58, 0
    %v83 = vsub.s32 0, %v58
    %v84 = vsel %vm82, %v83, %v58
    %v85 = vshrl.u32 %v84, 3
    %v86 = vand.u32 %v84, 7
    %v87 = vsub.s32 0, %v86
    %v88 = vsel %vm82, %v87, %v86
    %vm89 = vcmp.lt.s32.totalorder %v59, 0
    %v90 = vsub.s32 0, %v59
    %v91 = vsel %vm89, %v90, %v59
    %v92 = vshrl.u32 %v91, 3
    %v93 = vand.u32 %v91, 7
    %v94 = vsub.s32 0, %v93
    %v95 = vsel %vm89, %v94, %v93
    %vm96 = vcmp.lt.s32.totalorder %v60, 0
    %v97 = vsub.s32 0, %v60
    %v98 = vsel %vm96, %v97, %v60
    %v99 = vshrl.u32 %v98, 3
    %v100 = vand.u32 %v98, 7
    %v101 = vsub.s32 0, %v100
    %v102 = vsel %vm96, %v101, %v100
    %vm103 = vcmp.lt.s32.totalorder %v61, 0
    %v104 = vsub.s32 0, %v61
    %v105 = vsel %vm103, %v104, %v61
    %v106 = vshrl.u32 %v105, 3
    %v107 = vand.u32 %v105, 7
    %v108 = vsub.s32 0, %v107
    %v109 = vsel %vm103, %v108, %v107
    %vm110 = vcmp.lt.s32.totalorder %v62, 0
    %v111 = vsub.s32 0, %v62
    %v112 = vsel %vm110, %v111, %v62
    %v113 = vshrl.u32 %v112, 3
    %v114 = vand.u32 %v112, 7
    %v115 = vsub.s32 0, %v114
    %v116 = vsel %vm110, %v115, %v114
    %vm117 = vcmp.lt.s32.totalorder %v63, 0
    %v118 = vsub.s32 0, %v63
    %v119 = vsel %vm117, %v118, %v63
    %v120 = vshrl.u32 %v119, 3
    %v121 = vand.u32 %v119, 7
    %v122 = vsub.s32 0, %v121
    %v123 = vsel %vm117, %v122, %v121
    %vm124 = vcmp.lt.s32.totalorder %v64, 0
    %v125 = vsub.s32 0, %v64
    %v126 = vsel %vm124, %v125, %v64
    %v127 = vshrl.u32 %v126, 3
    %v128 = vand.u32 %v126, 7
    %v129 = vsub.s32 0, %v128
    %v130 = vsel %vm124, %v129, %v128
    %vm131 = vcmp.lt.s32.totalorder %v65, 0
    %v132 = vsub.s32 0, %v65
    %v133 = vsel %vm131, %v132, %v65
    %v134 = vshrl.u32 %v133, 3
    %v135 = vand.u32 %v133, 7
    %v136 = vsub.s32 0, %v135
    %v137 = vsel %vm131, %v136, %v135
    %vm138 = vcmp.lt.s32.totalorder %v66, 0
    %v139 = vsub.s32 0, %v66
    %v140 = vsel %vm138, %v139, %v66
    %v141 = vshrl.u32 %v140, 3
    %v142 = vand.u32 %v140, 7
    %v143 = vsub.s32 0, %v142
    %v144 = vsel %vm138, %v143, %v142
    %vm145 = vcmp.lt.s32.totalorder %v67, 0
    %v146 = vsub.s32 0, %v67
    %v147 = vsel %vm145, %v146, %v67
    %v148 = vshrl.u32 %v147, 3
    %v149 = vand.u32 %v147, 7
    %v150 = vsub.s32 0, %v149
    %v151 = vsel %vm145, %v150, %v149
    %vm152 = vcmp.lt.s32.totalorder %v68, 0
    %v153 = vsub.s32 0, %v68
    %v154 = vsel %vm152, %v153, %v68
    %v155 = vshrl.u32 %v154, 3
    %v156 = vand.u32 %v154, 7
    %v157 = vsub.s32 0, %v156
    %v158 = vsel %vm152, %v157, %v156
    %vm159 = vcmp.lt.s32.totalorder %v69, 0
    %v160 = vsub.s32 0, %v69
    %v161 = vsel %vm159, %v160, %v69
    %v162 = vshrl.u32 %v161, 3
    %v163 = vand.u32 %v161, 7
    %v164 = vsub.s32 0, %v163
    %v165 = vsel %vm159, %v164, %v163
    %vm166 = vcmp.lt.s32.totalorder %v70, 0
    %v167 = vsub.s32 0, %v70
    %v168 = vsel %vm166, %v167, %v70
    %v169 = vshrl.u32 %v168, 3
    %v170 = vand.u32 %v168, 7
    %v171 = vsub.s32 0, %v170
    %v172 = vsel %vm166, %v171, %v170
    %vm173 = vcmp.lt.s32.totalorder %v71, 0
    %v174 = vsub.s32 0, %v71
    %v175 = vsel %vm173, %v174, %v71
    %v176 = vshrl.u32 %v175, 3
    %v177 = vand.u32 %v175, 7
    %v178 = vsub.s32 0, %v177
    %v179 = vsel %vm173, %v178, %v177
    %vm180 = vcmp.lt.s32.totalorder %v72, 0
    %v181 = vsub.s32 0, %v72
    %v182 = vsel %vm180, %v181, %v72
    %v183 = vshrl.u32 %v182, 3
    %v184 = vand.u32 %v182, 7
    %v185 = vsub.s32 0, %v184
    %v186 = vsel %vm180, %v185, %v184
    %vm187 = vcmp.ne.s32.totalorder %v81, 0
    %vm188 = vcmp.ne.s32.totalorder %v88, 0
    %vm189 = vcmp.ne.s32.totalorder %v95, 0
    %vm190 = vcmp.ne.s32.totalorder %v102, 0
    %vm191 = vcmp.ne.s32.totalorder %v109, 0
    %vm192 = vcmp.ne.s32.totalorder %v116, 0
    %vm193 = vcmp.ne.s32.totalorder %v123, 0
    %vm194 = vcmp.ne.s32.totalorder %v130, 0
    %vm195 = vcmp.ne.s32.totalorder %v137, 0
    %vm196 = vcmp.ne.s32.totalorder %v144, 0
    %vm197 = vcmp.ne.s32.totalorder %v151, 0
    %vm198 = vcmp.ne.s32.totalorder %v158, 0
    %vm199 = vcmp.ne.s32.totalorder %v165, 0
    %vm200 = vcmp.ne.s32.totalorder %v172, 0
    %vm201 = vcmp.ne.s32.totalorder %v179, 0
    %vm202 = vcmp.ne.s32.totalorder %v186, 0
    %vm203 = vcmp.lt.s32.totalorder %v81, 0
    %vm204 = vcmp.lt.s32.totalorder %v88, 0
    %vm205 = vcmp.lt.s32.totalorder %v95, 0
    %vm206 = vcmp.lt.s32.totalorder %v102, 0
    %vm207 = vcmp.lt.s32.totalorder %v109, 0
    %vm208 = vcmp.lt.s32.totalorder %v116, 0
    %vm209 = vcmp.lt.s32.totalorder %v123, 0
    %vm210 = vcmp.lt.s32.totalorder %v130, 0
    %vm211 = vcmp.lt.s32.totalorder %v137, 0
    %vm212 = vcmp.lt.s32.totalorder %v144, 0
    %vm213 = vcmp.lt.s32.totalorder %v151, 0
    %vm214 = vcmp.lt.s32.totalorder %v158, 0
    %vm215 = vcmp.lt.s32.totalorder %v165, 0
    %vm216 = vcmp.lt.s32.totalorder %v172, 0
    %vm217 = vcmp.lt.s32.totalorder %v179, 0
    %vm218 = vcmp.lt.s32.totalorder %v186, 0
    %vm219 = vmand %vm203, %vm187
    %vm220 = vmand %vm204, %vm188
    %vm221 = vmand %vm205, %vm189
    %vm222 = vmand %vm206, %vm190
    %vm223 = vmand %vm207, %vm191
    %vm224 = vmand %vm208, %vm192
    %vm225 = vmand %vm209, %vm193
    %vm226 = vmand %vm210, %vm194
    %vm227 = vmand %vm211, %vm195
    %vm228 = vmand %vm212, %vm196
    %vm229 = vmand %vm213, %vm197
    %vm230 = vmand %vm214, %vm198
    %vm231 = vmand %vm215, %vm199
    %vm232 = vmand %vm216, %vm200
    %vm233 = vmand %vm217, %vm201
    %vm234 = vmand %vm218, %vm202
    %v235 = vadd.s32 %v81, 8
    %v236 = vadd.s32 %v88, 8
    %v237 = vadd.s32 %v95, 8
    %v238 = vadd.s32 %v102, 8
    %v239 = vadd.s32 %v109, 8
    %v240 = vadd.s32 %v116, 8
    %v241 = vadd.s32 %v123, 8
    %v242 = vadd.s32 %v130, 8
    %v243 = vadd.s32 %v137, 8
    %v244 = vadd.s32 %v144, 8
    %v245 = vadd.s32 %v151, 8
    %v246 = vadd.s32 %v158, 8
    %v247 = vadd.s32 %v165, 8
    %v248 = vadd.s32 %v172, 8
    %v249 = vadd.s32 %v179, 8
    %v250 = vadd.s32 %v186, 8
    %v251 = vsel %vm219, %v235, %v81
    %v252 = vsel %vm220, %v236, %v88
    %v253 = vsel %vm221, %v237, %v95
    %v254 = vsel %vm222, %v238, %v102
    %v255 = vsel %vm223, %v239, %v109
    %v256 = vsel %vm224, %v240, %v116
    %v257 = vsel %vm225, %v241, %v123
    %v258 = vsel %vm226, %v242, %v130
    %v259 = vsel %vm227, %v243, %v137
    %v260 = vsel %vm228, %v244, %v144
    %v261 = vsel %vm229, %v245, %v151
    %v262 = vsel %vm230, %v246, %v158
    %v263 = vsel %vm231, %v247, %v165
    %v264 = vsel %vm232, %v248, %v172
    %v265 = vsel %vm233, %v249, %v179
    %v266 = vsel %vm234, %v250, %v186
    %vm267 = vcmp.eq.s32.totalorder %v251, %v74
    %vm268 = vcmp.eq.s32.totalorder %v252, %v74
    %vm269 = vcmp.eq.s32.totalorder %v253, %v74
    %vm270 = vcmp.eq.s32.totalorder %v254, %v74
    %vm271 = vcmp.eq.s32.totalorder %v255, %v74
    %vm272 = vcmp.eq.s32.totalorder %v256, %v74
    %vm273 = vcmp.eq.s32.totalorder %v257, %v74
    %vm274 = vcmp.eq.s32.totalorder %v258, %v74
    %vm275 = vcmp.eq.s32.totalorder %v259, %v74
    %vm276 = vcmp.eq.s32.totalorder %v260, %v74
    %vm277 = vcmp.eq.s32.totalorder %v261, %v74
    %vm278 = vcmp.eq.s32.totalorder %v262, %v74
    %vm279 = vcmp.eq.s32.totalorder %v263, %v74
    %vm280 = vcmp.eq.s32.totalorder %v264, %v74
    %vm281 = vcmp.eq.s32.totalorder %v265, %v74
    %vm282 = vcmp.eq.s32.totalorder %v266, %v74
    %v283 = vsel %vm267, 1, 0
    %v284 = vsel %vm268, 1, 0
    %v285 = vsel %vm269, 1, 0
    %v286 = vsel %vm270, 1, 0
    %v287 = vsel %vm271, 1, 0
    %v288 = vsel %vm272, 1, 0
    %v289 = vsel %vm273, 1, 0
    %v290 = vsel %vm274, 1, 0
    %v291 = vsel %vm275, 1, 0
    %v292 = vsel %vm276, 1, 0
    %v293 = vsel %vm277, 1, 0
    %v294 = vsel %vm278, 1, 0
    %v295 = vsel %vm279, 1, 0
    %v296 = vsel %vm280, 1, 0
    %v297 = vsel %vm281, 1, 0
    %v298 = vsel %vm282, 1, 0
    %v299 = vcvt.s32.f32 %v283
    %v300 = vcvt.s32.f32 %v284
    %v301 = vcvt.s32.f32 %v285
    %v302 = vcvt.s32.f32 %v286
    %v303 = vcvt.s32.f32 %v287
    %v304 = vcvt.s32.f32 %v288
    %v305 = vcvt.s32.f32 %v289
    %v306 = vcvt.s32.f32 %v290
    %v307 = vcvt.s32.f32 %v291
    %v308 = vcvt.s32.f32 %v292
    %v309 = vcvt.s32.f32 %v293
    %v310 = vcvt.s32.f32 %v294
    %v311 = vcvt.s32.f32 %v295
    %v312 = vcvt.s32.f32 %v296
    %v313 = vcvt.s32.f32 %v297
    %v314 = vcvt.s32.f32 %v298
    %vm315 = vcmp.lt.s32.totalorder %v74, 0
    %v316 = vsub.s32 0, %v74
    %v317 = vsel %vm315, %v316, %v74
    %v318 = vshrl.u32 %v317, 3
    %v319 = vand.u32 %v317, 7
    %v320 = vsub.s32 0, %v319
    %v321 = vsel %vm315, %v320, %v319
    %vm322 = vcmp.ne.s32.totalorder %v321, 0
    %vm323 = vcmp.lt.s32.totalorder %v321, 0
    %vm324 = vmand %vm323, %vm322
    %v325 = vadd.s32 %v321, 8
    %v326 = vsel %vm324, %v325, %v321
    %vm327 = vcmp.eq.s32.totalorder %v326, %v57
    %v328 = vsel %vm327, 1, 0
    %v329 = vcvt.s32.f32 %v328
    %v330 = vld [vmem:[%s0] sm:$0xff]
    %v331 = vld [vmem:[%s0 + $0x8] sm:$0xff]
    %v332 = vld [vmem:[%s0 + $0x18] sm:$0xff]
    %v333 = vld [vmem:[%s0 + $0x20] sm:$0xff]
    %v334 = vld [vmem:[%s0 + $0x1] sm:$0xff]
    %v335 = vld [vmem:[%s0 + $0x9] sm:$0xff]
    %v336 = vld [vmem:[%s0 + $0x19] sm:$0xff]
    %v337 = vld [vmem:[%s0 + $0x21] sm:$0xff]
    %v338 = vld [vmem:[%s0 + $0x2] sm:$0xff]
    %v339 = vld [vmem:[%s0 + $0xa] sm:$0xff]
    %v340 = vld [vmem:[%s0 + $0x1a] sm:$0xff]
    %v341 = vld [vmem:[%s0 + $0x22] sm:$0xff]
    %346 = vrot.lane.b32.xlu0 %v334, 72
    %v347 = vpop.permute.xlu0 %346
    %348 = vrot.lane.b32.xlu0 %v335, 72
    %v349 = vpop.permute.xlu0 %348
    %350 = vrot.lane.b32.xlu0 %v336, 72
    %v351 = vpop.permute.xlu0 %350
    %352 = vrot.lane.b32.xlu0 %v337, 72
    %v353 = vpop.permute.xlu0 %352
    %362 = vrot.lane.b32.xlu0 %v338, 16
    %v363 = vpop.permute.xlu0 %362
    %364 = vrot.lane.b32.xlu0 %v339, 16
    %v365 = vpop.permute.xlu0 %364
    %366 = vrot.lane.b32.xlu0 %v340, 16
    %v367 = vpop.permute.xlu0 %366
    %368 = vrot.lane.b32.xlu0 %v341, 16
    %v369 = vpop.permute.xlu0 %368
    %vm374 = vcmask 588800
    %v375 = vsel %vm374, %v330, %v347
    %v376 = vsel %vm374, %v331, %v349
    %v377 = vsel %vm374, %v332, %v351
    %v378 = vsel %vm374, %v333, %v353
    %vm379 = vcmask 130048
    %v380 = vsel %vm379, %v347, %v363
    %v381 = vsel %vm379, %v349, %v365
    %v382 = vsel %vm379, %v351, %v367
    %v383 = vsel %vm379, %v353, %v369
    %v384 = vpack.c.bf16 %v376, %v375
    %v385 = vpack.c.bf16 %v381, %v380
    %v386 = vpack.c.bf16 %v378, %v377
    %v387 = vpack.c.bf16 %v383, %v382
    %v388 = vld [vmem:[#allocation3] sm:$0xf]
    %v389 = vld [vmem:[#allocation3 + $0x4] sm:$0xf]
    %v390 = vld [vmem:[#allocation3 + $0x8] sm:$0xf]
    %v391 = vld [vmem:[#allocation3 + $0xc] sm:$0xf]
    %v392 = vld [vmem:[#allocation3 + $0x10] sm:$0xf]
    %v393 = vld [vmem:[#allocation3 + $0x14] sm:$0xf]
    %v394 = vld [vmem:[#allocation3 + $0x18] sm:$0xf]
    %v395 = vld [vmem:[#allocation3 + $0x1c] sm:$0xf]
    %v396 = vld [vmem:[#allocation3 + $0x20] sm:$0xf]
    %v397 = vld [vmem:[#allocation3 + $0x24] sm:$0xf]
    %v398 = vld [vmem:[#allocation3 + $0x28] sm:$0xf]
    %v399 = vld [vmem:[#allocation3 + $0x2c] sm:$0xf]
    %v400 = vld [vmem:[#allocation3 + $0x30] sm:$0xf]
    %v401 = vld [vmem:[#allocation3 + $0x34] sm:$0xf]
    %v402 = vld [vmem:[#allocation3 + $0x38] sm:$0xf]
    %v403 = vld [vmem:[#allocation3 + $0x3c] sm:$0xf]
    %v404 = vld [vmem:[#allocation3 + $0x40] sm:$0xf]
    %v405 = vld [vmem:[#allocation3 + $0x44] sm:$0xf]
    %v406 = vld [vmem:[#allocation3 + $0x48] sm:$0xf]
    %v407 = vld [vmem:[#allocation3 + $0x4c] sm:$0xf]
    %v408 = vld [vmem:[#allocation3 + $0x50] sm:$0xf]
    %v409 = vld [vmem:[#allocation3 + $0x54] sm:$0xf]
    %v410 = vld [vmem:[#allocation3 + $0x58] sm:$0xf]
    %v411 = vld [vmem:[#allocation3 + $0x5c] sm:$0xf]
    %v412 = vld [vmem:[#allocation3 + $0x60] sm:$0xf]
    %v413 = vld [vmem:[#allocation3 + $0x64] sm:$0xf]
    %v414 = vld [vmem:[#allocation3 + $0x68] sm:$0xf]
    %v442 = vunpack.c.l.b16 %v388
    %v443 = vunpack.c.l.b16 %v389
    %v444 = vunpack.c.l.b16 %v390
    %v445 = vunpack.c.l.b16 %v391
    %v446 = vunpack.c.l.b16 %v392
    %v447 = vunpack.c.l.b16 %v393
    %v448 = vunpack.c.l.b16 %v394
    %v449 = vunpack.c.l.b16 %v395
    %v450 = vunpack.c.l.b16 %v396
    %v451 = vunpack.c.l.b16 %v397
    %v452 = vunpack.c.l.b16 %v398
    %v453 = vunpack.c.l.b16 %v399
    %v454 = vunpack.c.l.b16 %v400
    %v455 = vunpack.c.l.b16 %v401
    %v456 = vunpack.c.l.b16 %v402
    %v457 = vunpack.c.l.b16 %v403
    %v458 = vunpack.c.l.b16 %v404
    %v459 = vunpack.c.l.b16 %v405
    %v460 = vunpack.c.l.b16 %v406
    %v461 = vunpack.c.l.b16 %v407
    %v462 = vunpack.c.l.b16 %v408
    %v463 = vunpack.c.l.b16 %v409
    %v464 = vunpack.c.l.b16 %v410
    %v465 = vunpack.c.l.b16 %v411
    %v466 = vunpack.c.l.b16 %v412
    %v467 = vunpack.c.l.b16 %v413
    %v468 = vunpack.c.l.b16 %v414
    %v469 = vpack.c.b16 %v443, %v442
    %v470 = vpack.c.b16 %v445, %v444
    %v471 = vpack.c.b16 %v447, %v446
    %v472 = vpack.c.b16 %v449, %v448
    %v473 = vpack.c.b16 %v451, %v450
    %v474 = vpack.c.b16 %v453, %v452
    %v475 = vpack.c.b16 %v455, %v454
    %v476 = vpack.c.b16 %v457, %v456
    %v477 = vpack.c.b16 %v459, %v458
    %v478 = vpack.c.b16 %v461, %v460
    %v479 = vpack.c.b16 %v463, %v462
    %v480 = vpack.c.b16 %v465, %v464
    %v481 = vpack.c.b16 %v467, %v466
    %v482 = vpack.c.b16 %v468, %v468
    %vm496 = vcmask 719872
    %v498 = vsel %vm496, %v385, 0
    %v501 = vsel %vm496, %v387, 0
    %vm503 = vcmask 1043456
    %v505 = vsel %vm503, %v482, 0
    %507 = vmatprep.subr.bf16.mxu0 0
    %508 = vmatpush1.bf16.msra.mxu0 %v469
    %509 = vmatprep.subr.bf16.mxu0 0
    %510 = vmatpush1.bf16.msra.mxu0 %v470
    %511 = vmatprep.subr.bf16.mxu0 0
    %512 = vmatpush1.bf16.msra.mxu0 %v471
    %513 = vmatprep.subr.bf16.mxu0 0
    %514 = vmatpush1.bf16.msra.mxu0 %v472
    %515 = vmatprep.subr.bf16.mxu0 0
    %516 = vmatpush1.bf16.msra.mxu0 %v473
    %517 = vmatprep.subr.bf16.mxu0 0
    %518 = vmatpush1.bf16.msra.mxu0 %v474
    %519 = vmatprep.subr.bf16.mxu0 0
    %520 = vmatpush1.bf16.msra.mxu0 %v475
    %521 = vmatprep.subr.bf16.mxu0 0
    %522 = vmatpush1.bf16.msra.mxu0 %v476
    %523 = vmatprep.subr.bf16.mxu0 0
    %524 = vmatpush1.bf16.msra.mxu0 %v477
    %525 = vmatprep.subr.bf16.mxu0 0
    %526 = vmatpush1.bf16.msra.mxu0 %v478
    %527 = vmatprep.subr.bf16.mxu0 0
    %528 = vmatpush1.bf16.msra.mxu0 %v479
    %529 = vmatprep.subr.bf16.mxu0 0
    %530 = vmatpush1.bf16.msra.mxu0 %v480
    %531 = vmatprep.subr.bf16.mxu0 0
    %532 = vmatpush1.bf16.msra.mxu0 %v481
    %533 = vmatprep.subr.bf16.mxu0 0
    %534 = vmatpush1.bf16.msra.mxu0 %v505
    %535 = vmatprep.subr.bf16.mxu0 0
    %536 = vmatpush1.bf16.msra.mxu0 0
    %537 = vmatprep.subr.bf16.mxu0 0
    %538 = vmatpush1.bf16.msra.mxu0 0
    %539 = vmatprep.mubr.bf16.mxu0 %v498
    %540 = vmatmul.mubr.bf16.gmra.mrb[0].mxu0 %v384
    %v541 = vpop.f32.mrb[0].mxu0
    %v542 = vadd.f32 0.0, %v541
    %v543 = vpop.f32.mrb[0].mxu0
    %v544 = vpop.f32.mrb[0].mxu0
    %v545 = vadd.f32 0.0, %v544
    %v546 = vpop.f32.mrb[0].mxu0
    %547 = vmatprep.mubr.bf16.mxu0 %v501
    %548 = vmatmul.mubr.bf16.gmra.mrb[0].mxu0 %v386
    %v549 = vpop.f32.mrb[0].mxu0
    %v550 = vadd.f32 0.0, %v549
    %v551 = vpop.f32.mrb[0].mxu0
    %v552 = vpop.f32.mrb[0].mxu0
    %v553 = vadd.f32 0.0, %v552
    %v554 = vpop.f32.mrb[0].mxu0
    %555 = vdwg.mxu0
    %v556 = vadd.f32 %v542, %v545
    %v557 = vadd.f32 %v556, %v550
    %v558 = vadd.f32 %v557, %v553
    %v559 = vrot.slane %v558, 4
    %v560 = vadd.f32 %v558, %v559
    %v561 = vrot.slane %v560, 2
    %v562 = vadd.f32 %v560, %v561
    %v563 = vrot.slane %v562, 1
    %v564 = vadd.f32 %v562, %v563
    %v565 = vmul.f32 %v542, %v542
    %v566 = vmul.f32 %v545, %v545
    %v567 = vmul.f32 %v550, %v550
    %v568 = vmul.f32 %v553, %v553
    %v569 = vadd.f32 %v565, %v566
    %v570 = vadd.f32 %v569, %v567
    %v571 = vadd.f32 %v570, %v568
    %v572 = vrot.slane %v571, 4
    %v573 = vadd.f32 %v571, %v572
    %v574 = vrot.slane %v573, 2
    %v575 = vadd.f32 %v573, %v574
    %v576 = vrot.slane %v575, 1
    %v577 = vadd.f32 %v575, %v576
    %578 = vmatprep.subr.mxu0 0.0
    %579 = vmatpush1.msra.mxu0 %v299
    %580 = vmatprep.subr.mxu0 0.0
    %581 = vmatpush1.msra.mxu0 %v300
    %582 = vmatprep.subr.mxu0 0.0
    %583 = vmatpush1.msra.mxu0 %v301
    %584 = vmatprep.subr.mxu0 0.0
    %585 = vmatpush1.msra.mxu0 %v302
    %586 = vmatprep.subr.mxu0 0.0
    %587 = vmatpush1.msra.mxu0 %v303
    %588 = vmatprep.subr.mxu0 0.0
    %589 = vmatpush1.msra.mxu0 %v304
    %590 = vmatprep.subr.mxu0 0.0
    %591 = vmatpush1.msra.mxu0 %v305
    %592 = vmatprep.subr.mxu0 0.0
    %593 = vmatpush1.msra.mxu0 %v306
    %594 = vmatprep.subr.mxu0 0.0
    %595 = vmatpush1.msra.mxu0 %v307
    %596 = vmatprep.subr.mxu0 0.0
    %597 = vmatpush1.msra.mxu0 %v308
    %598 = vmatprep.subr.mxu0 0.0
    %599 = vmatpush1.msra.mxu0 %v309
    %600 = vmatprep.subr.mxu0 0.0
    %601 = vmatpush1.msra.mxu0 %v310
    %602 = vmatprep.subr.mxu0 0.0
    %603 = vmatpush1.msra.mxu0 %v311
    %604 = vmatprep.subr.mxu0 0.0
    %605 = vmatpush1.msra.mxu0 %v312
    %606 = vmatprep.subr.mxu0 0.0
    %607 = vmatpush1.msra.mxu0 %v313
    %608 = vmatprep.subr.mxu0 0.0
    %609 = vmatpush1.msra.mxu0 %v314
    %610 = vmatprep.subr.mxu0 0.0
    %611 = vmatpush1.msra.mxu0 0.0
    %612 = vmatprep.subr.mxu0 0.0
    %613 = vmatpush1.msra.mxu0 0.0
    %614 = vmatprep.subr.mxu0 0.0
    %615 = vmatpush1.msra.mxu0 0.0
    %616 = vmatprep.subr.mxu0 0.0
    %617 = vmatpush1.msra.mxu0 0.0
    %618 = vmatprep.subr.mxu0 0.0
    %619 = vmatpush1.msra.mxu0 0.0
    %620 = vmatprep.subr.mxu0 0.0
    %621 = vmatpush1.msra.mxu0 0.0
    %622 = vmatprep.subr.mxu0 0.0
    %623 = vmatpush1.msra.mxu0 0.0
    %624 = vmatprep.subr.mxu0 0.0
    %625 = vmatpush1.msra.mxu0 0.0
    %626 = vmatprep.subr.mxu0 0.0
    %627 = vmatpush1.msra.mxu0 0.0
    %628 = vmatprep.subr.mxu0 0.0
    %629 = vmatpush1.msra.mxu0 0.0
    %630 = vmatprep.subr.mxu0 0.0
    %631 = vmatpush1.msra.mxu0 0.0
    %632 = vmatprep.subr.mxu0 0.0
    %633 = vmatpush1.msra.mxu0 0.0
    %634 = vmatprep.subr.mxu0 0.0
    %635 = vmatpush1.msra.mxu0 0.0
    %636 = vmatprep.subr.mxu0 0.0
    %637 = vmatpush1.msra.mxu0 0.0
    %638 = vmatprep.subr.mxu0 0.0
    %639 = vmatpush1.msra.mxu0 0.0
    %640 = vmatprep.subr.mxu0 0.0
    %641 = vmatpush1.msra.mxu0 0.0
    %642 = vmatprep.mubr.f32.mxu0 0.0
    %643 = vmatmul.mubr.f32.gmra.mrb[0].mxu0 %v564
    %v644 = vpop.f32.mrb[0].mxu0
    %v645 = vadd.f32 0.0, %v644
    %v646 = vpop.f32.mrb[0].mxu0
    %647 = vdwg.mxu0
    %v648 = vmul.f32 %v645, 0.001953125
    %649 = vmatprep.subr.mxu0 0.0
    %650 = vmatpush1.msra.mxu0 %v299
    %651 = vmatprep.subr.mxu0 0.0
    %652 = vmatpush1.msra.mxu0 %v300
    %653 = vmatprep.subr.mxu0 0.0
    %654 = vmatpush1.msra.mxu0 %v301
    %655 = vmatprep.subr.mxu0 0.0
    %656 = vmatpush1.msra.mxu0 %v302
    %657 = vmatprep.subr.mxu0 0.0
    %658 = vmatpush1.msra.mxu0 %v303
    %659 = vmatprep.subr.mxu0 0.0
    %660 = vmatpush1.msra.mxu0 %v304
    %661 = vmatprep.subr.mxu0 0.0
    %662 = vmatpush1.msra.mxu0 %v305
    %663 = vmatprep.subr.mxu0 0.0
    %664 = vmatpush1.msra.mxu0 %v306
    %665 = vmatprep.subr.mxu0 0.0
    %666 = vmatpush1.msra.mxu0 %v307
    %667 = vmatprep.subr.mxu0 0.0
    %668 = vmatpush1.msra.mxu0 %v308
    %669 = vmatprep.subr.mxu0 0.0
    %670 = vmatpush1.msra.mxu0 %v309
    %671 = vmatprep.subr.mxu0 0.0
    %672 = vmatpush1.msra.mxu0 %v310
    %673 = vmatprep.subr.mxu0 0.0
    %674 = vmatpush1.msra.mxu0 %v311
    %675 = vmatprep.subr.mxu0 0.0
    %676 = vmatpush1.msra.mxu0 %v312
    %677 = vmatprep.subr.mxu0 0.0
    %678 = vmatpush1.msra.mxu0 %v313
    %679 = vmatprep.subr.mxu0 0.0
    %680 = vmatpush1.msra.mxu0 %v314
    %681 = vmatprep.subr.mxu0 0.0
    %682 = vmatpush1.msra.mxu0 0.0
    %683 = vmatprep.subr.mxu0 0.0
    %684 = vmatpush1.msra.mxu0 0.0
    %685 = vmatprep.subr.mxu0 0.0
    %686 = vmatpush1.msra.mxu0 0.0
    %687 = vmatprep.subr.mxu0 0.0
    %688 = vmatpush1.msra.mxu0 0.0
    %689 = vmatprep.subr.mxu0 0.0
    %690 = vmatpush1.msra.mxu0 0.0
    %691 = vmatprep.subr.mxu0 0.0
    %692 = vmatpush1.msra.mxu0 0.0
    %693 = vmatprep.subr.mxu0 0.0
    %694 = vmatpush1.msra.mxu0 0.0
    %695 = vmatprep.subr.mxu0 0.0
    %696 = vmatpush1.msra.mxu0 0.0
    %697 = vmatprep.subr.mxu0 0.0
    %698 = vmatpush1.msra.mxu0 0.0
    %699 = vmatprep.subr.mxu0 0.0
    %700 = vmatpush1.msra.mxu0 0.0
    %701 = vmatprep.subr.mxu0 0.0
    %702 = vmatpush1.msra.mxu0 0.0
    %703 = vmatprep.subr.mxu0 0.0
    %704 = vmatpush1.msra.mxu0 0.0
    %705 = vmatprep.subr.mxu0 0.0
    %706 = vmatpush1.msra.mxu0 0.0
    %707 = vmatprep.subr.mxu0 0.0
    %708 = vmatpush1.msra.mxu0 0.0
    %709 = vmatprep.subr.mxu0 0.0
    %710 = vmatpush1.msra.mxu0 0.0
    %711 = vmatprep.subr.mxu0 0.0
    %712 = vmatpush1.msra.mxu0 0.0
    %713 = vmatprep.mubr.f32.mxu0 0.0
    %714 = vmatmul.mubr.f32.gmra.mrb[0].mxu0 %v577
    %v715 = vpop.f32.mrb[0].mxu0
    %v716 = vadd.f32 0.0, %v715
    %v717 = vpop.f32.mrb[0].mxu0
    %718 = vdwg.mxu0
    %v719 = vmul.f32 %v716, 0.001953125
    %v720 = vmul.f32 %v648, %v648
    %v721 = vsub.f32 %v719, %v720
    %v722 = vld [vmem:[%s3] sm:$0x1]
    %v723 = vadd.f32 %v721, 1e-05
    %v724 = vrsqrt.pop %v723
    %v725 = vmul.f32 %v722, %v724
    %v726 = vld [vmem:[%s4] sm:$0x1]
    %v727 = vmul.f32 %v648, %v725
    %v728 = vsub.f32 %v726, %v727
    %vm729 = vcmask 64512
    %v731 = vsel %vm729, %v725, 0
    %733 = vmatprep.subr.mxu0 0.0
    %734 = vmatpush1.msra.mxu0 %v329
    %735 = vmatprep.subr.mxu0 0.0
    %736 = vmatpush1.msra.mxu0 0.0
    %737 = vmatprep.subr.mxu0 0.0
    %738 = vmatpush1.msra.mxu0 0.0
    %739 = vmatprep.subr.mxu0 0.0
    %740 = vmatpush1.msra.mxu0 0.0
    %741 = vmatprep.subr.mxu0 0.0
    %742 = vmatpush1.msra.mxu0 0.0
    %743 = vmatprep.subr.mxu0 0.0
    %744 = vmatpush1.msra.mxu0 0.0
    %745 = vmatprep.subr.mxu0 0.0
    %746 = vmatpush1.msra.mxu0 0.0
    %747 = vmatprep.subr.mxu0 0.0
    %748 = vmatpush1.msra.mxu0 0.0
    %749 = vmatprep.subr.mxu0 0.0
    %750 = vmatpush1.msra.mxu0 0.0
    %751 = vmatprep.subr.mxu0 0.0
    %752 = vmatpush1.msra.mxu0 0.0
    %753 = vmatprep.subr.mxu0 0.0
    %754 = vmatpush1.msra.mxu0 0.0
    %755 = vmatprep.subr.mxu0 0.0
    %756 = vmatpush1.msra.mxu0 0.0
    %757 = vmatprep.subr.mxu0 0.0
    %758 = vmatpush1.msra.mxu0 0.0
    %759 = vmatprep.subr.mxu0 0.0
    %760 = vmatpush1.msra.mxu0 0.0
    %761 = vmatprep.subr.mxu0 0.0
    %762 = vmatpush1.msra.mxu0 0.0
    %763 = vmatprep.subr.mxu0 0.0
    %764 = vmatpush1.msra.mxu0 0.0
    %765 = vmatprep.subr.mxu0 0.0
    %766 = vmatpush1.msra.mxu0 0.0
    %767 = vmatprep.subr.mxu0 0.0
    %768 = vmatpush1.msra.mxu0 0.0
    %769 = vmatprep.subr.mxu0 0.0
    %770 = vmatpush1.msra.mxu0 0.0
    %771 = vmatprep.subr.mxu0 0.0
    %772 = vmatpush1.msra.mxu0 0.0
    %773 = vmatprep.subr.mxu0 0.0
    %774 = vmatpush1.msra.mxu0 0.0
    %775 = vmatprep.subr.mxu0 0.0
    %776 = vmatpush1.msra.mxu0 0.0
    %777 = vmatprep.subr.mxu0 0.0
    %778 = vmatpush1.msra.mxu0 0.0
    %779 = vmatprep.subr.mxu0 0.0
    %780 = vmatpush1.msra.mxu0 0.0
    %781 = vmatprep.subr.mxu0 0.0
    %782 = vmatpush1.msra.mxu0 0.0
    %783 = vmatprep.subr.mxu0 0.0
    %784 = vmatpush1.msra.mxu0 0.0
    %785 = vmatprep.subr.mxu0 0.0
    %786 = vmatpush1.msra.mxu0 0.0
    %787 = vmatprep.subr.mxu0 0.0
    %788 = vmatpush1.msra.mxu0 0.0
    %789 = vmatprep.subr.mxu0 0.0
    %790 = vmatpush1.msra.mxu0 0.0
    %791 = vmatprep.subr.mxu0 0.0
    %792 = vmatpush1.msra.mxu0 0.0
    %793 = vmatprep.subr.mxu0 0.0
    %794 = vmatpush1.msra.mxu0 0.0
    %795 = vmatprep.subr.mxu0 0.0
    %796 = vmatpush1.msra.mxu0 0.0
    %797 = vmatprep.mubr.f32.mxu0 0.0
    %798 = vmatmul.mubr.f32.gmra.mrb[0].mxu0 %v731
    %v799 = vpop.f32.mrb[0].mxu0
    %v800 = vadd.f32 0.0, %v799
    %v801 = vpop.f32.mrb[0].mxu0
    %802 = vdwg.mxu0
    %v804 = vsel %vm729, %v728, 0
    %806 = vmatprep.subr.mxu0 0.0
    %807 = vmatpush1.msra.mxu0 %v329
    %808 = vmatprep.subr.mxu0 0.0
    %809 = vmatpush1.msra.mxu0 0.0
    %810 = vmatprep.subr.mxu0 0.0
    %811 = vmatpush1.msra.mxu0 0.0
    %812 = vmatprep.subr.mxu0 0.0
    %813 = vmatpush1.msra.mxu0 0.0
    %814 = vmatprep.subr.mxu0 0.0
    %815 = vmatpush1.msra.mxu0 0.0
    %816 = vmatprep.subr.mxu0 0.0
    %817 = vmatpush1.msra.mxu0 0.0
    %818 = vmatprep.subr.mxu0 0.0
    %819 = vmatpush1.msra.mxu0 0.0
    %820 = vmatprep.subr.mxu0 0.0
    %821 = vmatpush1.msra.mxu0 0.0
    %822 = vmatprep.subr.mxu0 0.0
    %823 = vmatpush1.msra.mxu0 0.0
    %824 = vmatprep.subr.mxu0 0.0
    %825 = vmatpush1.msra.mxu0 0.0
    %826 = vmatprep.subr.mxu0 0.0
    %827 = vmatpush1.msra.mxu0 0.0
    %828 = vmatprep.subr.mxu0 0.0
    %829 = vmatpush1.msra.mxu0 0.0
    %830 = vmatprep.subr.mxu0 0.0
    %831 = vmatpush1.msra.mxu0 0.0
    %832 = vmatprep.subr.mxu0 0.0
    %833 = vmatpush1.msra.mxu0 0.0
    %834 = vmatprep.subr.mxu0 0.0
    %835 = vmatpush1.msra.mxu0 0.0
    %836 = vmatprep.subr.mxu0 0.0
    %837 = vmatpush1.msra.mxu0 0.0
    %838 = vmatprep.subr.mxu0 0.0
    %839 = vmatpush1.msra.mxu0 0.0
    %840 = vmatprep.subr.mxu0 0.0
    %841 = vmatpush1.msra.mxu0 0.0
    %842 = vmatprep.subr.mxu0 0.0
    %843 = vmatpush1.msra.mxu0 0.0
    %844 = vmatprep.subr.mxu0 0.0
    %845 = vmatpush1.msra.mxu0 0.0
    %846 = vmatprep.subr.mxu0 0.0
    %847 = vmatpush1.msra.mxu0 0.0
    %848 = vmatprep.subr.mxu0 0.0
    %849 = vmatpush1.msra.mxu0 0.0
    %850 = vmatprep.subr.mxu0 0.0
    %851 = vmatpush1.msra.mxu0 0.0
    %852 = vmatprep.subr.mxu0 0.0
    %853 = vmatpush1.msra.mxu0 0.0
    %854 = vmatprep.subr.mxu0 0.0
    %855 = vmatpush1.msra.mxu0 0.0
    %856 = vmatprep.subr.mxu0 0.0
    %857 = vmatpush1.msra.mxu0 0.0
    %858 = vmatprep.subr.mxu0 0.0
    %859 = vmatpush1.msra.mxu0 0.0
    %860 = vmatprep.subr.mxu0 0.0
    %861 = vmatpush1.msra.mxu0 0.0
    %862 = vmatprep.subr.mxu0 0.0
    %863 = vmatpush1.msra.mxu0 0.0
    %864 = vmatprep.subr.mxu0 0.0
    %865 = vmatpush1.msra.mxu0 0.0
    %866 = vmatprep.subr.mxu0 0.0
    %867 = vmatpush1.msra.mxu0 0.0
    %868 = vmatprep.subr.mxu0 0.0
    %869 = vmatpush1.msra.mxu0 0.0
    %870 = vmatprep.mubr.f32.mxu0 0.0
    %871 = vmatmul.mubr.f32.gmra.mrb[0].mxu0 %v804
    %v872 = vpop.f32.mrb[0].mxu0
    %v873 = vadd.f32 0.0, %v872
    %v874 = vpop.f32.mrb[0].mxu0
    %875 = vdwg.mxu0
    %v876 = vlaneseq
    %v877 = vshrl.u32 %v876, 7
    %v878 = vsub.s32 0, %v877
    %v879 = vrot.slane %v800, %v878
    %v880 = vmul.f32 %v542, %v879
    %v881 = vmul.f32 %v545, %v879
    %v882 = vmul.f32 %v550, %v879
    %v883 = vmul.f32 %v553, %v879
    %v884 = vlaneseq
    %v885 = vshrl.u32 %v884, 7
    %v886 = vsub.s32 0, %v885
    %v887 = vrot.slane %v873, %v886
    %v888 = vadd.f32 %v880, %v887
    %v889 = vadd.f32 %v881, %v887
    %v890 = vadd.f32 %v882, %v887
    %v891 = vadd.f32 %v883, %v887
    %v892 = vmax.f32 %v888, 0.0
    %v893 = vmax.f32 %v889, 0.0
    %v894 = vmax.f32 %v890, 0.0
    %v895 = vmax.f32 %v891, 0.0
    %900 = vrot.lane.b32.xlu0 %v892, 8
    %v901 = vpop.permute.xlu0 %900
    %902 = vrot.lane.b32.xlu0 %v893, 8
    %v903 = vpop.permute.xlu0 %902
    %904 = vrot.lane.b32.xlu0 %v894, 8
    %v905 = vpop.permute.xlu0 %904
    %906 = vrot.lane.b32.xlu0 %v895, 8
    %v907 = vpop.permute.xlu0 %906
    %v912 = vsel %vm729, 0.0, %v901
    %v913 = vsel %vm729, 0.0, %v903
    %v914 = vsel %vm729, 0.0, %v905
    %v915 = vsel %vm729, 0.0, %v907
    %v916 = vsel %vm729, %v901, 0.0
    %v917 = vsel %vm729, %v903, 0.0
    %v918 = vsel %vm729, %v905, 0.0
    %v919 = vsel %vm729, %v907, 0.0
    %v920 = vlaneseq
    %vm921 = vcmp.ge.s32.totalorder %v920, 0
    %vm922 = vcmp.lt.s32.totalorder %v920, 144
    %vm923 = vmand %vm921, %vm922
    %924 = vst.msk [vmem:[#allocation2] ss:$8 sm:$0x3] %vm923, 0.0
    %925 = vst.msk [vmem:[#allocation2] ss:$8 sm:$0x0] %vm923, 0.0
    %s926 = scalar_lea.vmem [#allocation2], 48
    %927 = vst.msk [vmem:[%s926] ss:$8 sm:$0x3] %vm923, 0.0
    %928 = vst.msk [vmem:[%s926] ss:$8 sm:$0x0] %vm923, 0.0
    %s929 = scalar_lea.vmem [#allocation2], 33
    %930 = vst.msk [vmem:[%s929] ss:$8 sm:$0x3] %vm923, 0.0
    %931 = vst.msk [vmem:[%s929] ss:$8 sm:$0x0] %vm923, 0.0
    %s932 = scalar_lea.vmem [#allocation2], 81
    %933 = vst.msk [vmem:[%s932] ss:$8 sm:$0x3] %vm923, 0.0
    %934 = vst.msk [vmem:[%s932] ss:$8 sm:$0x0] %vm923, 0.0
    %vm943 = vcmask 1040384
    %v944 = vrot.slane %v912, 7
    %v945 = vrot.slane %v916, 7
    %v946 = vrot.slane %v913, 7
    %v947 = vsel %vm943, %v944, %v946
    %v948 = vrot.slane %v917, 7
    %v949 = vsel %vm943, %v945, %v948
    %v950 = vrot.slane %v914, 7
    %v951 = vrot.slane %v918, 7
    %v952 = vrot.slane %v915, 7
    %v953 = vsel %vm943, %v950, %v952
    %v954 = vrot.slane %v919, 7
    %v955 = vsel %vm943, %v951, %v954
    %968 = vst [vmem:[#allocation2] sm:$0xfe] %v944
    %vm969 = vcmask 130049
    %970 = vst.msk [vmem:[#allocation2 + $0x8] sm:$0xfe] %vm969, %v945
    %971 = vst [vmem:[#allocation2 + $0x10] sm:$0xff] %v947
    %972 = vst.msk [vmem:[#allocation2 + $0x18] sm:$0xff] %vm379, %v949
    %973 = vst [vmem:[#allocation2 + $0x20] sm:$0x1] %v946
    %vm974 = vcmask 122880
    %975 = vst.msk [vmem:[#allocation2 + $0x28] sm:$0x1] %vm974, %v948
    %976 = vst [vmem:[#allocation2 + $0x30] sm:$0xfe] %v950
    %977 = vst.msk [vmem:[#allocation2 + $0x38] sm:$0xfe] %vm969, %v951
    %978 = vst [vmem:[#allocation2 + $0x40] sm:$0xff] %v953
    %979 = vst.msk [vmem:[#allocation2 + $0x48] sm:$0xff] %vm379, %v955
    %980 = vst [vmem:[#allocation2 + $0x50] sm:$0x1] %v952
    %981 = vst.msk [vmem:[#allocation2 + $0x58] sm:$0x1] %vm974, %v954
    %v982 = vld [vmem:[#allocation2] sm:$0xff]
    %v983 = vld [vmem:[#allocation2 + $0x8] sm:$0xff]
    %v984 = vld [vmem:[#allocation2 + $0x10] sm:$0xff]
    %v985 = vld [vmem:[#allocation2 + $0x18] sm:$0xff]
    %v986 = vld [vmem:[#allocation2 + $0x30] sm:$0xff]
    %v987 = vld [vmem:[#allocation2 + $0x38] sm:$0xff]
    %v988 = vld [vmem:[#allocation2 + $0x40] sm:$0xff]
    %v989 = vld [vmem:[#allocation2 + $0x48] sm:$0xff]
    %v990 = vld [vmem:[#allocation2] sm:$0xfe]
    %v991 = vld [vmem:[#allocation2 + $0x8] sm:$0xfe]
    %v992 = vld [vmem:[#allocation2 + $0x20] sm:$0x1]
    %v993 = vld [vmem:[#allocation2 + $0x28] sm:$0x1]
    %v994 = vld [vmem:[#allocation2 + $0x30] sm:$0xfe]
    %v995 = vld [vmem:[#allocation2 + $0x38] sm:$0xfe]
    %v996 = vld [vmem:[#allocation2 + $0x50] sm:$0x1]
    %v997 = vld [vmem:[#allocation2 + $0x58] sm:$0x1]
    %v998 = vld [vmem:[#allocation2] sm:$0xfc]
    %v999 = vld [vmem:[#allocation2 + $0x8] sm:$0xfc]
    %v1000 = vld [vmem:[#allocation2 + $0x20] sm:$0x3]
    %v1001 = vld [vmem:[#allocation2 + $0x28] sm:$0x3]
    %v1002 = vld [vmem:[#allocation2 + $0x30] sm:$0xfc]
    %v1003 = vld [vmem:[#allocation2 + $0x38] sm:$0xfc]
    %v1004 = vld [vmem:[#allocation2 + $0x50] sm:$0x3]
    %v1005 = vld [vmem:[#allocation2 + $0x58] sm:$0x3]
    %vm1018 = vcmask 1046528
    %v1019 = vrot.slane %v990, 1
    %v1020 = vrot.slane %v984, 1
    %v1021 = vsel %vm1018, %v1019, %v1020
    %v1022 = vrot.slane %v991, 1
    %v1023 = vrot.slane %v985, 1
    %v1024 = vsel %vm1018, %v1022, %v1023
    %v1025 = vrot.slane %v992, 1
    %v1026 = vsel %vm1018, %v1020, %v1025
    %v1027 = vrot.slane %v993, 1
    %v1028 = vsel %vm1018, %v1023, %v1027
    %v1029 = vrot.slane %v994, 1
    %v1030 = vrot.slane %v988, 1
    %v1031 = vsel %vm1018, %v1029, %v1030
    %v1032 = vrot.slane %v995, 1
    %v1033 = vrot.slane %v989, 1
    %v1034 = vsel %vm1018, %v1032, %v1033
    %v1035 = vrot.slane %v996, 1
    %v1036 = vsel %vm1018, %v1030, %v1035
    %v1037 = vrot.slane %v997, 1
    %v1038 = vsel %vm1018, %v1033, %v1037
    %1039 = vrot.lane.b32.xlu0 %v1021, 16
    %v1040 = vpop.permute.xlu0 %1039
    %1041 = vrot.lane.b32.xlu0 %v1024, 16
    %v1042 = vpop.permute.xlu0 %1041
    %1043 = vrot.lane.b32.xlu0 %v1026, 16
    %v1044 = vpop.permute.xlu0 %1043
    %1045 = vrot.lane.b32.xlu0 %v1028, 16
    %v1046 = vpop.permute.xlu0 %1045
    %1047 = vrot.lane.b32.xlu0 %v1031, 16
    %v1048 = vpop.permute.xlu0 %1047
    %1049 = vrot.lane.b32.xlu0 %v1034, 16
    %v1050 = vpop.permute.xlu0 %1049
    %1051 = vrot.lane.b32.xlu0 %v1036, 16
    %v1052 = vpop.permute.xlu0 %1051
    %1053 = vrot.lane.b32.xlu0 %v1038, 16
    %v1054 = vpop.permute.xlu0 %1053
    %v1055 = vsel %vm379, %v1040, %v1042
    %v1056 = vsel %vm379, %v1044, %v1046
    %v1057 = vsel %vm379, %v1048, %v1050
    %v1058 = vsel %vm379, %v1052, %v1054
    %vm1075 = vcmask 1045504
    %v1076 = vrot.slane %v998, 2
    %v1077 = vrot.slane %v984, 2
    %v1078 = vsel %vm1075, %v1076, %v1077
    %v1079 = vrot.slane %v999, 2
    %v1080 = vrot.slane %v985, 2
    %v1081 = vsel %vm1075, %v1079, %v1080
    %v1082 = vrot.slane %v1000, 2
    %v1083 = vsel %vm1075, %v1077, %v1082
    %v1084 = vrot.slane %v1001, 2
    %v1085 = vsel %vm1075, %v1080, %v1084
    %v1086 = vrot.slane %v1002, 2
    %v1087 = vrot.slane %v988, 2
    %v1088 = vsel %vm1075, %v1086, %v1087
    %v1089 = vrot.slane %v1003, 2
    %v1090 = vrot.slane %v989, 2
    %v1091 = vsel %vm1075, %v1089, %v1090
    %v1092 = vrot.slane %v1004, 2
    %v1093 = vsel %vm1075, %v1087, %v1092
    %v1094 = vrot.slane %v1005, 2
    %v1095 = vsel %vm1075, %v1090, %v1094
    %1096 = vrot.lane.b32.xlu0 %v1078, 32
    %v1097 = vpop.permute.xlu0 %1096
    %1098 = vrot.lane.b32.xlu0 %v1081, 32
    %v1099 = vpop.permute.xlu0 %1098
    %1100 = vrot.lane.b32.xlu0 %v1083, 32
    %v1101 = vpop.permute.xlu0 %1100
    %1102 = vrot.lane.b32.xlu0 %v1085, 32
    %v1103 = vpop.permute.xlu0 %1102
    %1104 = vrot.lane.b32.xlu0 %v1088, 32
    %v1105 = vpop.permute.xlu0 %1104
    %1106 = vrot.lane.b32.xlu0 %v1091, 32
    %v1107 = vpop.permute.xlu0 %1106
    %1108 = vrot.lane.b32.xlu0 %v1093, 32
    %v1109 = vpop.permute.xlu0 %1108
    %1110 = vrot.lane.b32.xlu0 %v1095, 32
    %v1111 = vpop.permute.xlu0 %1110
    %vm1112 = vcmask 261120
    %v1113 = vsel %vm1112, %v1097, %v1099
    %v1114 = vsel %vm1112, %v1101, %v1103
    %v1115 = vsel %vm1112, %v1105, %v1107
    %v1116 = vsel %vm1112, %v1109, %v1111
    %v1125 = vsel %vm379, %v983, %v1040
    %v1126 = vsel %vm379, %v985, %v1044
    %v1127 = vsel %vm379, %v987, %v1048
    %v1128 = vsel %vm379, %v989, %v1052
    %v1129 = vsel %vm1112, %v1055, %v1097
    %v1130 = vsel %vm1112, %v1056, %v1101
    %v1131 = vsel %vm1112, %v1057, %v1105
    %v1132 = vsel %vm1112, %v1058, %v1109
    %v1133 = vpack.c.bf16 %v984, %v982
    %v1134 = vpack.c.bf16 %v1126, %v1125
    %v1135 = vpack.c.bf16 %v1130, %v1129
    %v1136 = vpack.c.bf16 %v1114, %v1113
    %v1137 = vpack.c.bf16 %v988, %v986
    %v1138 = vpack.c.bf16 %v1128, %v1127
    %v1139 = vpack.c.bf16 %v1132, %v1131
    %v1140 = vpack.c.bf16 %v1116, %v1115
    %v1141 = vld [vmem:[#allocation6] sm:$0xf]
    %v1142 = vld [vmem:[#allocation6 + $0x4] sm:$0xf]
    %v1143 = vld [vmem:[#allocation6 + $0x8] sm:$0xf]
    %v1144 = vld [vmem:[#allocation6 + $0xc] sm:$0xf]
    %v1145 = vld [vmem:[#allocation6 + $0x10] sm:$0xf]
    %v1146 = vld [vmem:[#allocation6 + $0x14] sm:$0xf]
    %v1147 = vld [vmem:[#allocation6 + $0x18] sm:$0xf]
    %v1148 = vld [vmem:[#allocation6 + $0x1c] sm:$0xf]
    %v1149 = vld [vmem:[#allocation6 + $0x20] sm:$0xf]
    %v1150 = vld [vmem:[#allocation6 + $0x24] sm:$0xf]
    %v1151 = vld [vmem:[#allocation6 + $0x28] sm:$0xf]
    %v1152 = vld [vmem:[#allocation6 + $0x2c] sm:$0xf]
    %v1153 = vld [vmem:[#allocation6 + $0x30] sm:$0xf]
    %v1154 = vld [vmem:[#allocation6 + $0x34] sm:$0xf]
    %v1155 = vld [vmem:[#allocation6 + $0x38] sm:$0xf]
    %v1156 = vld [vmem:[#allocation6 + $0x3c] sm:$0xf]
    %v1157 = vld [vmem:[#allocation6 + $0x40] sm:$0xf]
    %v1158 = vld [vmem:[#allocation6 + $0x44] sm:$0xf]
    %v1159 = vld [vmem:[#allocation6 + $0x48] sm:$0xf]
    %v1160 = vld [vmem:[#allocation6 + $0x4c] sm:$0xf]
    %v1161 = vld [vmem:[#allocation6 + $0x50] sm:$0xf]
    %v1162 = vld [vmem:[#allocation6 + $0x54] sm:$0xf]
    %v1163 = vld [vmem:[#allocation6 + $0x58] sm:$0xf]
    %v1164 = vld [vmem:[#allocation6 + $0x5c] sm:$0xf]
    %v1165 = vld [vmem:[#allocation6 + $0x60] sm:$0xf]
    %v1166 = vld [vmem:[#allocation6 + $0x64] sm:$0xf]
    %v1167 = vld [vmem:[#allocation6 + $0x68] sm:$0xf]
    %v1168 = vld [vmem:[#allocation6 + $0x6c] sm:$0xf]
    %v1169 = vld [vmem:[#allocation6 + $0x70] sm:$0xf]
    %v1170 = vld [vmem:[#allocation6 + $0x74] sm:$0xf]
    %v1171 = vld [vmem:[#allocation6 + $0x78] sm:$0xf]
    %v1172 = vld [vmem:[#allocation6 + $0x7c] sm:$0xf]
    %v1173 = vld [vmem:[#allocation6 + $0x80] sm:$0xf]
    %v1174 = vld [vmem:[#allocation6 + $0x84] sm:$0xf]
    %v1175 = vld [vmem:[#allocation6 + $0x88] sm:$0xf]
    %v1176 = vld [vmem:[#allocation6 + $0x8c] sm:$0xf]
    %v1177 = vld [vmem:[#allocation6 + $0x90] sm:$0xf]
    %v1178 = vld [vmem:[#allocation6 + $0x94] sm:$0xf]
    %v1179 = vld [vmem:[#allocation6 + $0x98] sm:$0xf]
    %v1180 = vld [vmem:[#allocation6 + $0x9c] sm:$0xf]
    %v1181 = vld [vmem:[#allocation6 + $0xa0] sm:$0xf]
    %v1182 = vld [vmem:[#allocation6 + $0xa4] sm:$0xf]
    %v1183 = vld [vmem:[#allocation6 + $0xa8] sm:$0xf]
    %v1184 = vld [vmem:[#allocation6 + $0xac] sm:$0xf]
    %v1185 = vld [vmem:[#allocation6 + $0xb0] sm:$0xf]
    %v1186 = vld [vmem:[#allocation6 + $0xb4] sm:$0xf]
    %v1187 = vld [vmem:[#allocation6 + $0xb8] sm:$0xf]
    %v1188 = vld [vmem:[#allocation6 + $0xbc] sm:$0xf]
    %v1189 = vld [vmem:[#allocation6 + $0xc0] sm:$0xf]
    %v1190 = vld [vmem:[#allocation6 + $0xc4] sm:$0xf]
    %v1191 = vld [vmem:[#allocation6 + $0xc8] sm:$0xf]
    %v1192 = vld [vmem:[#allocation6 + $0xcc] sm:$0xf]
    %v1193 = vld [vmem:[#allocation6 + $0xd0] sm:$0xf]
    %v1194 = vld [vmem:[#allocation6 + $0xd4] sm:$0xf]
    %v1249 = vunpack.c.l.b16 %v1141
    %v1250 = vunpack.c.l.b16 %v1142
    %v1251 = vunpack.c.l.b16 %v1143
    %v1252 = vunpack.c.l.b16 %v1144
    %v1253 = vunpack.c.l.b16 %v1145
    %v1254 = vunpack.c.l.b16 %v1146
    %v1255 = vunpack.c.l.b16 %v1147
    %v1256 = vunpack.c.l.b16 %v1148
    %v1257 = vunpack.c.l.b16 %v1149
    %v1258 = vunpack.c.l.b16 %v1150
    %v1259 = vunpack.c.l.b16 %v1151
    %v1260 = vunpack.c.l.b16 %v1152
    %v1261 = vunpack.c.l.b16 %v1153
    %v1262 = vunpack.c.l.b16 %v1154
    %v1263 = vunpack.c.l.b16 %v1155
    %v1264 = vunpack.c.l.b16 %v1156
    %v1265 = vunpack.c.l.b16 %v1157
    %v1266 = vunpack.c.l.b16 %v1158
    %v1267 = vunpack.c.l.b16 %v1159
    %v1268 = vunpack.c.l.b16 %v1160
    %v1269 = vunpack.c.l.b16 %v1161
    %v1270 = vunpack.c.l.b16 %v1162
    %v1271 = vunpack.c.l.b16 %v1163
    %v1272 = vunpack.c.l.b16 %v1164
    %v1273 = vunpack.c.l.b16 %v1165
    %v1274 = vunpack.c.l.b16 %v1166
    %v1275 = vunpack.c.l.b16 %v1167
    %v1276 = vunpack.c.l.b16 %v1168
    %v1277 = vunpack.c.l.b16 %v1169
    %v1278 = vunpack.c.l.b16 %v1170
    %v1279 = vunpack.c.l.b16 %v1171
    %v1280 = vunpack.c.l.b16 %v1172
    %v1281 = vunpack.c.l.b16 %v1173
    %v1282 = vunpack.c.l.b16 %v1174
    %v1283 = vunpack.c.l.b16 %v1175
    %v1284 = vunpack.c.l.b16 %v1176
    %v1285 = vunpack.c.l.b16 %v1177
    %v1286 = vunpack.c.l.b16 %v1178
    %v1287 = vunpack.c.l.b16 %v1179
    %v1288 = vunpack.c.l.b16 %v1180
    %v1289 = vunpack.c.l.b16 %v1181
    %v1290 = vunpack.c.l.b16 %v1182
    %v1291 = vunpack.c.l.b16 %v1183
    %v1292 = vunpack.c.l.b16 %v1184
    %v1293 = vunpack.c.l.b16 %v1185
    %v1294 = vunpack.c.l.b16 %v1186
    %v1295 = vunpack.c.l.b16 %v1187
    %v1296 = vunpack.c.l.b16 %v1188
    %v1297 = vunpack.c.l.b16 %v1189
    %v1298 = vunpack.c.l.b16 %v1190
    %v1299 = vunpack.c.l.b16 %v1191
    %v1300 = vunpack.c.l.b16 %v1192
    %v1301 = vunpack.c.l.b16 %v1193
    %v1302 = vunpack.c.l.b16 %v1194
    %v1303 = vpack.c.b16 %v1250, %v1249
    %v1304 = vpack.c.b16 %v1252, %v1251
    %v1305 = vpack.c.b16 %v1254, %v1253
    %v1306 = vpack.c.b16 %v1256, %v1255
    %v1307 = vpack.c.b16 %v1258, %v1257
    %v1308 = vpack.c.b16 %v1260, %v1259
    %v1309 = vpack.c.b16 %v1262, %v1261
    %v1310 = vpack.c.b16 %v1264, %v1263
    %v1311 = vpack.c.b16 %v1266, %v1265
    %v1312 = vpack.c.b16 %v1268, %v1267
    %v1313 = vpack.c.b16 %v1270, %v1269
    %v1314 = vpack.c.b16 %v1272, %v1271
    %v1315 = vpack.c.b16 %v1274, %v1273
    %v1316 = vpack.c.b16 %v1276, %v1275
    %v1317 = vpack.c.b16 %v1278, %v1277
    %v1318 = vpack.c.b16 %v1280, %v1279
    %v1319 = vpack.c.b16 %v1282, %v1281
    %v1320 = vpack.c.b16 %v1284, %v1283
    %v1321 = vpack.c.b16 %v1286, %v1285
    %v1322 = vpack.c.b16 %v1288, %v1287
    %v1323 = vpack.c.b16 %v1290, %v1289
    %v1324 = vpack.c.b16 %v1292, %v1291
    %v1325 = vpack.c.b16 %v1294, %v1293
    %v1326 = vpack.c.b16 %v1296, %v1295
    %v1327 = vpack.c.b16 %v1298, %v1297
    %v1328 = vpack.c.b16 %v1300, %v1299
    %v1329 = vpack.c.b16 %v1302, %v1301
    %vm1357 = vcmask 392192
    %v1359 = vsel %vm1357, %v1136, 0
    %v1362 = vsel %vm1357, %v1140, 0
    %1364 = vmatprep.subr.bf16.mxu0 0
    %1365 = vmatpush1.bf16.msra.mxu0 %v1303
    %1366 = vmatprep.subr.bf16.mxu0 0
    %1367 = vmatpush1.bf16.msra.mxu0 %v1304
    %1368 = vmatprep.subr.bf16.mxu0 0
    %1369 = vmatpush1.bf16.msra.mxu0 %v1305
    %1370 = vmatprep.subr.bf16.mxu0 0
    %1371 = vmatpush1.bf16.msra.mxu0 %v1306
    %1372 = vmatprep.subr.bf16.mxu0 0
    %1373 = vmatpush1.bf16.msra.mxu0 %v1307
    %1374 = vmatprep.subr.bf16.mxu0 0
    %1375 = vmatpush1.bf16.msra.mxu0 %v1308
    %1376 = vmatprep.subr.bf16.mxu0 0
    %1377 = vmatpush1.bf16.msra.mxu0 %v1309
    %1378 = vmatprep.subr.bf16.mxu0 0
    %1379 = vmatpush1.bf16.msra.mxu0 %v1310
    %1380 = vmatprep.subr.bf16.mxu0 0
    %1381 = vmatpush1.bf16.msra.mxu0 %v1311
    %1382 = vmatprep.subr.bf16.mxu0 0
    %1383 = vmatpush1.bf16.msra.mxu0 %v1312
    %1384 = vmatprep.subr.bf16.mxu0 0
    %1385 = vmatpush1.bf16.msra.mxu0 %v1313
    %1386 = vmatprep.subr.bf16.mxu0 0
    %1387 = vmatpush1.bf16.msra.mxu0 %v1314
    %1388 = vmatprep.subr.bf16.mxu0 0
    %1389 = vmatpush1.bf16.msra.mxu0 %v1315
    %1390 = vmatprep.subr.bf16.mxu0 0
    %1391 = vmatpush1.bf16.msra.mxu0 %v1316
    %1392 = vmatprep.subr.bf16.mxu0 0
    %1393 = vmatpush1.bf16.msra.mxu0 %v1317
    %1394 = vmatprep.subr.bf16.mxu0 0
    %1395 = vmatpush1.bf16.msra.mxu0 %v1318
    %1396 = vmatprep.mubr.bf16.mxu0 %v1134
    %1397 = vmatmul.mubr.bf16.gmra.mrb[0].mxu0 %v1133
    %v1398 = vpop.f32.mrb[0].mxu0
    %v1399 = vadd.f32 0.0, %v1398
    %v1400 = vpop.f32.mrb[0].mxu0
    %v1401 = vpop.f32.mrb[0].mxu0
    %v1402 = vadd.f32 0.0, %v1401
    %v1403 = vpop.f32.mrb[0].mxu0
    %1404 = vmatprep.mubr.bf16.mxu0 %v1138
    %1405 = vmatmul.mubr.bf16.gmra.mrb[0].mxu0 %v1137
    %v1406 = vpop.f32.mrb[0].mxu0
    %v1407 = vadd.f32 0.0, %v1406
    %v1408 = vpop.f32.mrb[0].mxu0
    %v1409 = vpop.f32.mrb[0].mxu0
    %v1410 = vadd.f32 0.0, %v1409
    %v1411 = vpop.f32.mrb[0].mxu0
    %1412 = vdwg.mxu0
    %1413 = vmatprep.subr.bf16.mxu0 0
    %1414 = vmatpush1.bf16.msra.mxu0 %v1319
    %1415 = vmatprep.subr.bf16.mxu0 0
    %1416 = vmatpush1.bf16.msra.mxu0 %v1320
    %1417 = vmatprep.subr.bf16.mxu0 0
    %1418 = vmatpush1.bf16.msra.mxu0 %v1321
    %1419 = vmatprep.subr.bf16.mxu0 0
    %1420 = vmatpush1.bf16.msra.mxu0 %v1322
    %1421 = vmatprep.subr.bf16.mxu0 0
    %1422 = vmatpush1.bf16.msra.mxu0 %v1323
    %1423 = vmatprep.subr.bf16.mxu0 0
    %1424 = vmatpush1.bf16.msra.mxu0 %v1324
    %1425 = vmatprep.subr.bf16.mxu0 0
    %1426 = vmatpush1.bf16.msra.mxu0 %v1325
    %1427 = vmatprep.subr.bf16.mxu0 0
    %1428 = vmatpush1.bf16.msra.mxu0 %v1326
    %1429 = vmatprep.subr.bf16.mxu0 0
    %1430 = vmatpush1.bf16.msra.mxu0 %v1327
    %1431 = vmatprep.subr.bf16.mxu0 0
    %1432 = vmatpush1.bf16.msra.mxu0 %v1328
    %1433 = vmatprep.subr.bf16.mxu0 0
    %1434 = vmatpush1.bf16.msra.mxu0 %v1329
    %1435 = vmatprep.subr.bf16.mxu0 0
    %1436 = vmatpush1.bf16.msra.mxu0 0
    %1437 = vmatprep.subr.bf16.mxu0 0
    %1438 = vmatpush1.bf16.msra.mxu0 0
    %1439 = vmatprep.subr.bf16.mxu0 0
    %1440 = vmatpush1.bf16.msra.mxu0 0
    %1441 = vmatprep.subr.bf16.mxu0 0
    %1442 = vmatpush1.bf16.msra.mxu0 0
    %1443 = vmatprep.subr.bf16.mxu0 0
    %1444 = vmatpush1.bf16.msra.mxu0 0
    %1445 = vmatprep.mubr.bf16.mxu0 %v1359
    %1446 = vmatmul.mubr.bf16.gmra.mrb[0].mxu0 %v1135
    %v1447 = vpop.f32.mrb[0].mxu0
    %v1448 = vadd.f32 %v1399, %v1447
    %v1449 = vpop.f32.mrb[0].mxu0
    %v1450 = vpop.f32.mrb[0].mxu0
    %v1451 = vadd.f32 %v1402, %v1450
    %v1452 = vpop.f32.mrb[0].mxu0
    %1453 = vmatprep.mubr.bf16.mxu0 %v1362
    %1454 = vmatmul.mubr.bf16.gmra.mrb[0].mxu0 %v1139
    %v1455 = vpop.f32.mrb[0].mxu0
    %v1456 = vadd.f32 %v1407, %v1455
    %v1457 = vpop.f32.mrb[0].mxu0
    %v1458 = vpop.f32.mrb[0].mxu0
    %v1459 = vadd.f32 %v1410, %v1458
    %v1460 = vpop.f32.mrb[0].mxu0
    %1461 = vdwg.mxu0
    %v1462 = vadd.f32 %v1448, %v1451
    %v1463 = vadd.f32 %v1462, %v1456
    %v1464 = vadd.f32 %v1463, %v1459
    %v1465 = vrot.slane %v1464, 4
    %v1466 = vadd.f32 %v1464, %v1465
    %v1467 = vrot.slane %v1466, 2
    %v1468 = vadd.f32 %v1466, %v1467
    %v1469 = vrot.slane %v1468, 1
    %v1470 = vadd.f32 %v1468, %v1469
    %v1471 = vmul.f32 %v1448, %v1448
    %v1472 = vmul.f32 %v1451, %v1451
    %v1473 = vmul.f32 %v1456, %v1456
    %v1474 = vmul.f32 %v1459, %v1459
    %v1475 = vadd.f32 %v1471, %v1472
    %v1476 = vadd.f32 %v1475, %v1473
    %v1477 = vadd.f32 %v1476, %v1474
    %v1478 = vrot.slane %v1477, 4
    %v1479 = vadd.f32 %v1477, %v1478
    %v1480 = vrot.slane %v1479, 2
    %v1481 = vadd.f32 %v1479, %v1480
    %v1482 = vrot.slane %v1481, 1
    %v1483 = vadd.f32 %v1481, %v1482
    %1484 = vmatprep.subr.mxu0 0.0
    %1485 = vmatpush1.msra.mxu0 %v299
    %1486 = vmatprep.subr.mxu0 0.0
    %1487 = vmatpush1.msra.mxu0 %v300
    %1488 = vmatprep.subr.mxu0 0.0
    %1489 = vmatpush1.msra.mxu0 %v301
    %1490 = vmatprep.subr.mxu0 0.0
    %1491 = vmatpush1.msra.mxu0 %v302
    %1492 = vmatprep.subr.mxu0 0.0
    %1493 = vmatpush1.msra.mxu0 %v303
    %1494 = vmatprep.subr.mxu0 0.0
    %1495 = vmatpush1.msra.mxu0 %v304
    %1496 = vmatprep.subr.mxu0 0.0
    %1497 = vmatpush1.msra.mxu0 %v305
    %1498 = vmatprep.subr.mxu0 0.0
    %1499 = vmatpush1.msra.mxu0 %v306
    %1500 = vmatprep.subr.mxu0 0.0
    %1501 = vmatpush1.msra.mxu0 %v307
    %1502 = vmatprep.subr.mxu0 0.0
    %1503 = vmatpush1.msra.mxu0 %v308
    %1504 = vmatprep.subr.mxu0 0.0
    %1505 = vmatpush1.msra.mxu0 %v309
    %1506 = vmatprep.subr.mxu0 0.0
    %1507 = vmatpush1.msra.mxu0 %v310
    %1508 = vmatprep.subr.mxu0 0.0
    %1509 = vmatpush1.msra.mxu0 %v311
    %1510 = vmatprep.subr.mxu0 0.0
    %1511 = vmatpush1.msra.mxu0 %v312
    %1512 = vmatprep.subr.mxu0 0.0
    %1513 = vmatpush1.msra.mxu0 %v313
    %1514 = vmatprep.subr.mxu0 0.0
    %1515 = vmatpush1.msra.mxu0 %v314
    %1516 = vmatprep.subr.mxu0 0.0
    %1517 = vmatpush1.msra.mxu0 0.0
    %1518 = vmatprep.subr.mxu0 0.0
    %1519 = vmatpush1.msra.mxu0 0.0
    %1520 = vmatprep.subr.mxu0 0.0
    %1521 = vmatpush1.msra.mxu0 0.0
    %1522 = vmatprep.subr.mxu0 0.0
    %1523 = vmatpush1.msra.mxu0 0.0
    %1524 = vmatprep.subr.mxu0 0.0
    %1525 = vmatpush1.msra.mxu0 0.0
    %1526 = vmatprep.subr.mxu0 0.0
    %1527 = vmatpush1.msra.mxu0 0.0
    %1528 = vmatprep.subr.mxu0 0.0
    %1529 = vmatpush1.msra.mxu0 0.0
    %1530 = vmatprep.subr.mxu0 0.0
    %1531 = vmatpush1.msra.mxu0 0.0
    %1532 = vmatprep.subr.mxu0 0.0
    %1533 = vmatpush1.msra.mxu0 0.0
    %1534 = vmatprep.subr.mxu0 0.0
    %1535 = vmatpush1.msra.mxu0 0.0
    %1536 = vmatprep.subr.mxu0 0.0
    %1537 = vmatpush1.msra.mxu0 0.0
    %1538 = vmatprep.subr.mxu0 0.0
    %1539 = vmatpush1.msra.mxu0 0.0
    %1540 = vmatprep.subr.mxu0 0.0
    %1541 = vmatpush1.msra.mxu0 0.0
    %1542 = vmatprep.subr.mxu0 0.0
    %1543 = vmatpush1.msra.mxu0 0.0
    %1544 = vmatprep.subr.mxu0 0.0
    %1545 = vmatpush1.msra.mxu0 0.0
    %1546 = vmatprep.subr.mxu0 0.0
    %1547 = vmatpush1.msra.mxu0 0.0
    %1548 = vmatprep.mubr.f32.mxu0 0.0
    %1549 = vmatmul.mubr.f32.gmra.mrb[0].mxu0 %v1470
    %v1550 = vpop.f32.mrb[0].mxu0
    %v1551 = vadd.f32 0.0, %v1550
    %v1552 = vpop.f32.mrb[0].mxu0
    %1553 = vdwg.mxu0
    %v1554 = vmul.f32 %v1551, 0.001953125
    %1555 = vmatprep.subr.mxu0 0.0
    %1556 = vmatpush1.msra.mxu0 %v299
    %1557 = vmatprep.subr.mxu0 0.0
    %1558 = vmatpush1.msra.mxu0 %v300
    %1559 = vmatprep.subr.mxu0 0.0
    %1560 = vmatpush1.msra.mxu0 %v301
    %1561 = vmatprep.subr.mxu0 0.0
    %1562 = vmatpush1.msra.mxu0 %v302
    %1563 = vmatprep.subr.mxu0 0.0
    %1564 = vmatpush1.msra.mxu0 %v303
    %1565 = vmatprep.subr.mxu0 0.0
    %1566 = vmatpush1.msra.mxu0 %v304
    %1567 = vmatprep.subr.mxu0 0.0
    %1568 = vmatpush1.msra.mxu0 %v305
    %1569 = vmatprep.subr.mxu0 0.0
    %1570 = vmatpush1.msra.mxu0 %v306
    %1571 = vmatprep.subr.mxu0 0.0
    %1572 = vmatpush1.msra.mxu0 %v307
    %1573 = vmatprep.subr.mxu0 0.0
    %1574 = vmatpush1.msra.mxu0 %v308
    %1575 = vmatprep.subr.mxu0 0.0
    %1576 = vmatpush1.msra.mxu0 %v309
    %1577 = vmatprep.subr.mxu0 0.0
    %1578 = vmatpush1.msra.mxu0 %v310
    %1579 = vmatprep.subr.mxu0 0.0
    %1580 = vmatpush1.msra.mxu0 %v311
    %1581 = vmatprep.subr.mxu0 0.0
    %1582 = vmatpush1.msra.mxu0 %v312
    %1583 = vmatprep.subr.mxu0 0.0
    %1584 = vmatpush1.msra.mxu0 %v313
    %1585 = vmatprep.subr.mxu0 0.0
    %1586 = vmatpush1.msra.mxu0 %v314
    %1587 = vmatprep.subr.mxu0 0.0
    %1588 = vmatpush1.msra.mxu0 0.0
    %1589 = vmatprep.subr.mxu0 0.0
    %1590 = vmatpush1.msra.mxu0 0.0
    %1591 = vmatprep.subr.mxu0 0.0
    %1592 = vmatpush1.msra.mxu0 0.0
    %1593 = vmatprep.subr.mxu0 0.0
    %1594 = vmatpush1.msra.mxu0 0.0
    %1595 = vmatprep.subr.mxu0 0.0
    %1596 = vmatpush1.msra.mxu0 0.0
    %1597 = vmatprep.subr.mxu0 0.0
    %1598 = vmatpush1.msra.mxu0 0.0
    %1599 = vmatprep.subr.mxu0 0.0
    %1600 = vmatpush1.msra.mxu0 0.0
    %1601 = vmatprep.subr.mxu0 0.0
    %1602 = vmatpush1.msra.mxu0 0.0
    %1603 = vmatprep.subr.mxu0 0.0
    %1604 = vmatpush1.msra.mxu0 0.0
    %1605 = vmatprep.subr.mxu0 0.0
    %1606 = vmatpush1.msra.mxu0 0.0
    %1607 = vmatprep.subr.mxu0 0.0
    %1608 = vmatpush1.msra.mxu0 0.0
    %1609 = vmatprep.subr.mxu0 0.0
    %1610 = vmatpush1.msra.mxu0 0.0
    %1611 = vmatprep.subr.mxu0 0.0
    %1612 = vmatpush1.msra.mxu0 0.0
    %1613 = vmatprep.subr.mxu0 0.0
    %1614 = vmatpush1.msra.mxu0 0.0
    %1615 = vmatprep.subr.mxu0 0.0
    %1616 = vmatpush1.msra.mxu0 0.0
    %1617 = vmatprep.subr.mxu0 0.0
    %1618 = vmatpush1.msra.mxu0 0.0
    %1619 = vmatprep.mubr.f32.mxu0 0.0
    %1620 = vmatmul.mubr.f32.gmra.mrb[0].mxu0 %v1483
    %v1621 = vpop.f32.mrb[0].mxu0
    %v1622 = vadd.f32 0.0, %v1621
    %v1623 = vpop.f32.mrb[0].mxu0
    %1624 = vdwg.mxu0
    %v1625 = vmul.f32 %v1622, 0.001953125
    %v1626 = vmul.f32 %v1554, %v1554
    %v1627 = vsub.f32 %v1625, %v1626
    %v1628 = vld [vmem:[%s5] sm:$0x1]
    %v1629 = vadd.f32 %v1627, 1e-05
    %v1630 = vrsqrt.pop %v1629
    %v1631 = vmul.f32 %v1628, %v1630
    %v1632 = vld [vmem:[%s6] sm:$0x1]
    %v1633 = vmul.f32 %v1554, %v1631
    %v1634 = vsub.f32 %v1632, %v1633
    %v1636 = vsel %vm729, %v1631, 0
    %1638 = vmatprep.subr.mxu0 0.0
    %1639 = vmatpush1.msra.mxu0 %v329
    %1640 = vmatprep.subr.mxu0 0.0
    %1641 = vmatpush1.msra.mxu0 0.0
    %1642 = vmatprep.subr.mxu0 0.0
    %1643 = vmatpush1.msra.mxu0 0.0
    %1644 = vmatprep.subr.mxu0 0.0
    %1645 = vmatpush1.msra.mxu0 0.0
    %1646 = vmatprep.subr.mxu0 0.0
    %1647 = vmatpush1.msra.mxu0 0.0
    %1648 = vmatprep.subr.mxu0 0.0
    %1649 = vmatpush1.msra.mxu0 0.0
    %1650 = vmatprep.subr.mxu0 0.0
    %1651 = vmatpush1.msra.mxu0 0.0
    %1652 = vmatprep.subr.mxu0 0.0
    %1653 = vmatpush1.msra.mxu0 0.0
    %1654 = vmatprep.subr.mxu0 0.0
    %1655 = vmatpush1.msra.mxu0 0.0
    %1656 = vmatprep.subr.mxu0 0.0
    %1657 = vmatpush1.msra.mxu0 0.0
    %1658 = vmatprep.subr.mxu0 0.0
    %1659 = vmatpush1.msra.mxu0 0.0
    %1660 = vmatprep.subr.mxu0 0.0
    %1661 = vmatpush1.msra.mxu0 0.0
    %1662 = vmatprep.subr.mxu0 0.0
    %1663 = vmatpush1.msra.mxu0 0.0
    %1664 = vmatprep.subr.mxu0 0.0
    %1665 = vmatpush1.msra.mxu0 0.0
    %1666 = vmatprep.subr.mxu0 0.0
    %1667 = vmatpush1.msra.mxu0 0.0
    %1668 = vmatprep.subr.mxu0 0.0
    %1669 = vmatpush1.msra.mxu0 0.0
    %1670 = vmatprep.subr.mxu0 0.0
    %1671 = vmatpush1.msra.mxu0 0.0
    %1672 = vmatprep.subr.mxu0 0.0
    %1673 = vmatpush1.msra.mxu0 0.0
    %1674 = vmatprep.subr.mxu0 0.0
    %1675 = vmatpush1.msra.mxu0 0.0
    %1676 = vmatprep.subr.mxu0 0.0
    %1677 = vmatpush1.msra.mxu0 0.0
    %1678 = vmatprep.subr.mxu0 0.0
    %1679 = vmatpush1.msra.mxu0 0.0
    %1680 = vmatprep.subr.mxu0 0.0
    %1681 = vmatpush1.msra.mxu0 0.0
    %1682 = vmatprep.subr.mxu0 0.0
    %1683 = vmatpush1.msra.mxu0 0.0
    %1684 = vmatprep.subr.mxu0 0.0
    %1685 = vmatpush1.msra.mxu0 0.0
    %1686 = vmatprep.subr.mxu0 0.0
    %1687 = vmatpush1.msra.mxu0 0.0
    %1688 = vmatprep.subr.mxu0 0.0
    %1689 = vmatpush1.msra.mxu0 0.0
    %1690 = vmatprep.subr.mxu0 0.0
    %1691 = vmatpush1.msra.mxu0 0.0
    %1692 = vmatprep.subr.mxu0 0.0
    %1693 = vmatpush1.msra.mxu0 0.0
    %1694 = vmatprep.subr.mxu0 0.0
    %1695 = vmatpush1.msra.mxu0 0.0
    %1696 = vmatprep.subr.mxu0 0.0
    %1697 = vmatpush1.msra.mxu0 0.0
    %1698 = vmatprep.subr.mxu0 0.0
    %1699 = vmatpush1.msra.mxu0 0.0
    %1700 = vmatprep.subr.mxu0 0.0
    %1701 = vmatpush1.msra.mxu0 0.0
    %1702 = vmatprep.mubr.f32.mxu0 0.0
    %1703 = vmatmul.mubr.f32.gmra.mrb[0].mxu0 %v1636
    %v1704 = vpop.f32.mrb[0].mxu0
    %v1705 = vadd.f32 0.0, %v1704
    %v1706 = vpop.f32.mrb[0].mxu0
    %1707 = vdwg.mxu0
    %v1709 = vsel %vm729, %v1634, 0
    %1711 = vmatprep.subr.mxu0 0.0
    %1712 = vmatpush1.msra.mxu0 %v329
    %1713 = vmatprep.subr.mxu0 0.0
    %1714 = vmatpush1.msra.mxu0 0.0
    %1715 = vmatprep.subr.mxu0 0.0
    %1716 = vmatpush1.msra.mxu0 0.0
    %1717 = vmatprep.subr.mxu0 0.0
    %1718 = vmatpush1.msra.mxu0 0.0
    %1719 = vmatprep.subr.mxu0 0.0
    %1720 = vmatpush1.msra.mxu0 0.0
    %1721 = vmatprep.subr.mxu0 0.0
    %1722 = vmatpush1.msra.mxu0 0.0
    %1723 = vmatprep.subr.mxu0 0.0
    %1724 = vmatpush1.msra.mxu0 0.0
    %1725 = vmatprep.subr.mxu0 0.0
    %1726 = vmatpush1.msra.mxu0 0.0
    %1727 = vmatprep.subr.mxu0 0.0
    %1728 = vmatpush1.msra.mxu0 0.0
    %1729 = vmatprep.subr.mxu0 0.0
    %1730 = vmatpush1.msra.mxu0 0.0
    %1731 = vmatprep.subr.mxu0 0.0
    %1732 = vmatpush1.msra.mxu0 0.0
    %1733 = vmatprep.subr.mxu0 0.0
    %1734 = vmatpush1.msra.mxu0 0.0
    %1735 = vmatprep.subr.mxu0 0.0
    %1736 = vmatpush1.msra.mxu0 0.0
    %1737 = vmatprep.subr.mxu0 0.0
    %1738 = vmatpush1.msra.mxu0 0.0
    %1739 = vmatprep.subr.mxu0 0.0
    %1740 = vmatpush1.msra.mxu0 0.0
    %1741 = vmatprep.subr.mxu0 0.0
    %1742 = vmatpush1.msra.mxu0 0.0
    %1743 = vmatprep.subr.mxu0 0.0
    %1744 = vmatpush1.msra.mxu0 0.0
    %1745 = vmatprep.subr.mxu0 0.0
    %1746 = vmatpush1.msra.mxu0 0.0
    %1747 = vmatprep.subr.mxu0 0.0
    %1748 = vmatpush1.msra.mxu0 0.0
    %1749 = vmatprep.subr.mxu0 0.0
    %1750 = vmatpush1.msra.mxu0 0.0
    %1751 = vmatprep.subr.mxu0 0.0
    %1752 = vmatpush1.msra.mxu0 0.0
    %1753 = vmatprep.subr.mxu0 0.0
    %1754 = vmatpush1.msra.mxu0 0.0
    %1755 = vmatprep.subr.mxu0 0.0
    %1756 = vmatpush1.msra.mxu0 0.0
    %1757 = vmatprep.subr.mxu0 0.0
    %1758 = vmatpush1.msra.mxu0 0.0
    %1759 = vmatprep.subr.mxu0 0.0
    %1760 = vmatpush1.msra.mxu0 0.0
    %1761 = vmatprep.subr.mxu0 0.0
    %1762 = vmatpush1.msra.mxu0 0.0
    %1763 = vmatprep.subr.mxu0 0.0
    %1764 = vmatpush1.msra.mxu0 0.0
    %1765 = vmatprep.subr.mxu0 0.0
    %1766 = vmatpush1.msra.mxu0 0.0
    %1767 = vmatprep.subr.mxu0 0.0
    %1768 = vmatpush1.msra.mxu0 0.0
    %1769 = vmatprep.subr.mxu0 0.0
    %1770 = vmatpush1.msra.mxu0 0.0
    %1771 = vmatprep.subr.mxu0 0.0
    %1772 = vmatpush1.msra.mxu0 0.0
    %1773 = vmatprep.subr.mxu0 0.0
    %1774 = vmatpush1.msra.mxu0 0.0
    %1775 = vmatprep.mubr.f32.mxu0 0.0
    %1776 = vmatmul.mubr.f32.gmra.mrb[0].mxu0 %v1709
    %v1777 = vpop.f32.mrb[0].mxu0
    %v1778 = vadd.f32 0.0, %v1777
    %v1779 = vpop.f32.mrb[0].mxu0
    %1780 = vdwg.mxu0
    %v1781 = vlaneseq
    %v1782 = vshrl.u32 %v1781, 7
    %v1783 = vsub.s32 0, %v1782
    %v1784 = vrot.slane %v1705, %v1783
    %v1785 = vmul.f32 %v1448, %v1784
    %v1786 = vmul.f32 %v1451, %v1784
    %v1787 = vmul.f32 %v1456, %v1784
    %v1788 = vmul.f32 %v1459, %v1784
    %v1789 = vlaneseq
    %v1790 = vshrl.u32 %v1789, 7
    %v1791 = vsub.s32 0, %v1790
    %v1792 = vrot.slane %v1778, %v1791
    %v1793 = vadd.f32 %v1785, %v1792
    %v1794 = vadd.f32 %v1786, %v1792
    %v1795 = vadd.f32 %v1787, %v1792
    %v1796 = vadd.f32 %v1788, %v1792
    %v1797 = vmax.f32 %v1793, 0.0
    %v1798 = vmax.f32 %v1794, 0.0
    %v1799 = vmax.f32 %v1795, 0.0
    %v1800 = vmax.f32 %v1796, 0.0
    %1801 = vst [vmem:[#allocation8] sm:$0xff] %v1797
    %1802 = vst [vmem:[#allocation8 + $0x8] sm:$0xff] %v1798
    %1803 = vst [vmem:[#allocation8 + $0x10] sm:$0xff] %v1799
    %1804 = vst [vmem:[#allocation8 + $0x18] sm:$0xff] %v1800
    // Predicated region
    $region38: #{tpu_custom_call.1} parent=1 // pred_check
      _
    $region39: #{tpu_custom_call.1} parent=1 // pred_check_branch
      %1806 = sbr.rel (0) target = $region41
    $region40: #{tpu_custom_call.1} parent=1 // pred_region
      %s1808 = ssub.s32 512, 512
      %1809 = vsyncadd [#allocation5], %s1808
      %s1810 = sshll.u32 [#allocation8], 4
      %s1811 = int_to_ptr.vmem [resolvable:$true] %s1810
      %1816 = dma.vmem_to_hbm [thread:$0]  %s1811, 512, %s7, [#allocation5], 128, 128, 8
    $region41: #{tpu_custom_call.1} parent=1 // pred_fallthru
      _
    // Predicated region
    $region42: #{tpu_custom_call.1} parent=1 // pred_check
      _
    $region43: #{tpu_custom_call.1} parent=1 // pred_check_branch
      %1818 = sbr.rel (0) target = $region45
    $region44: #{tpu_custom_call.1} parent=1 // pred_region
      %1819 = dma.done [#allocation5], 512
    $region45: #{tpu_custom_call.1} parent=1 // pred_fallthru
      _
    %1820 = vsyncpa [#allocation4], 1
    %1821 = vsyncpa [#allocation7], 1
    %1822 = vsyncpa [#allocation5], 1

</llo_original>
